<compile_context>
chip_gen: v7x
topology: tpu7x:2x2x1
jax: 0.10.0
libtpu: 0.0.40
codegen_flags: <defaults>
</compile_context>

<pallas_src>
import functools

import jax
import jax.numpy as jnp
from jax.experimental import pallas as pl
from jax.experimental.pallas import tpu as pltpu

LEAKY_SLOPE = 0.2
BN_EPS = 1e-5
LANE = 128


def _round_up(x, m):
    return (x + m - 1) // m * m


def _default_vmem_limit():
    # ~3/4 of physical VMEM: ~96 MiB on v5e/v6e (128 MiB), ~48 MiB on v7x (64 MiB).
    try:
        cap = getattr(pltpu.get_tpu_info(), "vmem_capacity_bytes", None)
        if cap:
            return int(cap * 3 // 4)
    except Exception:
        pass
    return 48 * 1024 * 1024


VMEM_LIMIT = _default_vmem_limit()


# ----------------------- fused ResidualConv kernel -------------------------- #
def _make_kernel(Bt, Ho, Wo, Cp):
    M = Bt * Ho * Wo

    def kernel(p_ref, w1r_ref, sc1r_ref, sh1r_ref, w2_ref, sc2_ref, sh2_ref,
               o_ref, hpad_ref, col_ref):
        # ---- stem: conv1+BN1+LReLU and rconv+BNr fused into ONE matmul -----
        # RHS is W1 || Wr (K1p, 2*Cp) -> 256-wide MXU N dimension.
        y = jnp.dot(p_ref[...], w1r_ref[...], preferred_element_type=jnp.float32)
        y = y * sc1r_ref[...] + sh1r_ref[...]               # f32 BN epilogue
        h = y[:, :Cp]
        h = jnp.where(h >= 0.0, h, LEAKY_SLOPE * h)         # LeakyReLU (net branch)
        r = y[:, Cp:]                                        # residual branch (no act)

        # ---- conv2 padding=1 halo: zero VMEM buffer, write interior --------
        hpad_ref[...] = jnp.zeros_like(hpad_ref)
        hpad_ref[:, 1:Ho + 1, 1:Wo + 1, :] = h.reshape(Bt, Ho, Wo, Cp)

        # ---- in-VMEM im2col -> single K = 9*Cp matmul (fills MXU depth) ----
        for t in range(9):
            dy, dx = divmod(t, 3)
            tap = hpad_ref[:, dy:dy + Ho, dx:dx + Wo, :]
            col_ref[:, t * Cp:(t + 1) * Cp] = (
                tap.reshape(M, Cp).astype(col_ref.dtype))

        acc = jnp.dot(col_ref[...], w2_ref[...], preferred_element_type=jnp.float32)
        acc = acc * sc2_ref[...] + sh2_ref[...] + r          # BN2 + residual
        o_ref[...] = jnp.where(acc >= 0.0, acc, LEAKY_SLOPE * acc).astype(o_ref.dtype)

    return kernel


def residual_conv_pallas(p1, w1r, sc1r, sh1r, w2, sc2, sh2, *, Bt, Ho, Wo, Cp):
    rows, K1p = p1.shape
    rows_blk = Bt * Ho * Wo
    grid = rows // rows_blk

    flops = 2 * rows * (K1p * 2 * Cp + 9 * Cp * Cp)
    bytes_accessed = (rows * K1p * 2                       # patches in
                      + K1p * 2 * Cp * 2 + 9 * Cp * Cp * 2  # weights
                      + 6 * Cp * 4                          # BN scale/shift
                      + rows * Cp * 2)                      # bf16 output

    return pl.pallas_call(
        _make_kernel(Bt, Ho, Wo, Cp),
        out_shape=jax.ShapeDtypeStruct((rows, Cp), jnp.bfloat16),
        grid=(grid,),
        in_specs=[
            pl.BlockSpec((rows_blk, K1p), lambda i: (i, 0)),   # stride-2 patches
            pl.BlockSpec((K1p, 2 * Cp), lambda i: (0, 0)),     # W1 || Wr (bf16)
            pl.BlockSpec((1, 2 * Cp), lambda i: (0, 0)),       # BN1||BNr scale
            pl.BlockSpec((1, 2 * Cp), lambda i: (0, 0)),       # BN1||BNr shift
            pl.BlockSpec((9 * Cp, Cp), lambda i: (0, 0)),      # W2 (tap-major)
            pl.BlockSpec((1, Cp), lambda i: (0, 0)),           # BN2 scale
            pl.BlockSpec((1, Cp), lambda i: (0, 0)),           # BN2 shift
        ],
        out_specs=pl.BlockSpec((rows_blk, Cp), lambda i: (i, 0)),
        scratch_shapes=[
            pltpu.VMEM((Bt, Ho + 2, Wo + 2, Cp), jnp.float32),  # padded h1 (halo)
            pltpu.VMEM((rows_blk, 9 * Cp), jnp.bfloat16),       # conv2 im2col
        ],
        compiler_params=pltpu.CompilerParams(
            dimension_semantics=("parallel",),
            vmem_limit_bytes=VMEM_LIMIT),
        cost_estimate=pl.CostEstimate(flops=flops, transcendentals=0,
                                      bytes_accessed=bytes_accessed),
    )(p1, w1r, sc1r, sh1r, w2, sc2, sh2)


# ------------------------------ JAX glue ------------------------------------ #
def _im2col(x_nhwc, stride, K1p):
    """3x3, pad=1 patch extraction -> (N, Ho, Wo, K1p), tap order (dy, dx, c)."""
    N, H, W, C = x_nhwc.shape
    xp = jnp.pad(x_nhwc, ((0, 0), (1, 1), (1, 1), (0, 0)))
    Ho = (H + 2 - 3) // stride + 1
    Wo = (W + 2 - 3) // stride + 1
    taps = []
    for dy in range(3):
        for dx in range(3):
            taps.append(xp[:, dy:dy + (Ho - 1) * stride + 1:stride,
                           dx:dx + (Wo - 1) * stride + 1:stride, :])
    p = jnp.stack(taps, axis=-2).reshape(N, Ho, Wo, 9 * C)
    if K1p != 9 * C:
        p = jnp.pad(p, ((0, 0), (0, 0), (0, 0), (0, K1p - 9 * C)))
    return p, Ho, Wo


def _bn_params(gamma, beta, rm, rv):
    scale = gamma / jnp.sqrt(rv + BN_EPS)
    shift = beta - rm * scale
    return scale, shift


def _stem_weight(w_oihw, K1p, Cp):
    """(Cout,Cin,3,3) -> (K1p, Cp): im2col row order (dy,dx,cin), zero-padded."""
    Cout, Cin = w_oihw.shape[:2]
    m = jnp.transpose(w_oihw, (2, 3, 1, 0)).reshape(9 * Cin, Cout)
    return jnp.pad(m, ((0, K1p - 9 * Cin), (0, Cp - Cout)))


def _conv2_weight(w_oihw, Cp):
    """(Cout,Cin2,3,3) -> (9*Cp, Cp): tap-major rows, channel-padded."""
    Cout, Cin2 = w_oihw.shape[:2]
    m = jnp.transpose(w_oihw, (2, 3, 1, 0)).reshape(9, Cin2, Cout)
    m = jnp.pad(m, ((0, 0), (0, Cp - Cin2), (0, Cp - Cout)))
    return m.reshape(9 * Cp, Cp)


def _pad_row(v, Cp):
    return jnp.pad(v.astype(jnp.float32), (0, Cp - v.shape[0])).reshape(1, Cp)


@functools.partial(jax.jit, static_argnames=("sampling",))
def residual_conv_forward(x_nchw, params, sampling="down"):
    assert sampling in ("down", "none")
    stride = 2 if sampling == "down" else 1
    Cout, Cin = params["w1"].shape[:2]
    Cp = _round_up(Cout, LANE)                # lane-dense channel dim
    K1p = _round_up(9 * Cin, 16)              # bf16 sublane-aligned K dim

    s1, b1 = _bn_params(params["g1"], params["b1"], params["rm1"], params["rv1"])
    s2, b2 = _bn_params(params["g2"], params["b2"], params["rm2"], params["rv2"])
    sr, br = _bn_params(params["gr"], params["br"], params["rmr"], params["rvr"])

    # bf16 matmul operands; BN scale/shift stay f32 (applied as an epilogue).
    w1r = jnp.concatenate([_stem_weight(params["w1"], K1p, Cp),
                           _stem_weight(params["wr"], K1p, Cp)],
                          axis=1).astype(jnp.bfloat16)
    sc1r = jnp.concatenate([_pad_row(s1, Cp), _pad_row(sr, Cp)], axis=1)
    sh1r = jnp.concatenate([_pad_row(b1, Cp), _pad_row(br, Cp)], axis=1)
    w2 = _conv2_weight(params["w2"], Cp).astype(jnp.bfloat16)
    sc2, sh2 = _pad_row(s2, Cp), _pad_row(b2, Cp)

    # NCHW -> NHWC, bf16 matmul inputs (f32 accumulation inside the kernel).
    x = jnp.transpose(x_nchw, (0, 2, 3, 1)).astype(jnp.bfloat16)
    p1, Ho, Wo = _im2col(x, stride, K1p)
    N = x.shape[0]
    M_img = Ho * Wo

    # Images per grid block: target ~512 matmul rows; block rows must be /8.
    Bt = max(1, min(N, max(1, 512 // M_img)))
    Npad = _round_up(N, Bt)
    if Npad // Bt > 1 and (Bt * M_img) % 8 != 0:
        Bt, Npad = N, N                        # single-block fallback
    if Npad != N:
        p1 = jnp.pad(p1, ((0, Npad - N), (0, 0), (0, 0), (0, 0)))
    p1 = p1.reshape(Npad * M_img, K1p)

    y = residual_conv_pallas(p1, w1r, sc1r, sh1r, w2, sc2, sh2,
                             Bt=Bt, Ho=Ho, Wo=Wo, Cp=Cp)   # (rows, Cp) bf16
    y = y.reshape(Npad, Ho, Wo, Cp)[:N, :, :, :Cout]
    return jnp.transpose(y, (0, 3, 1, 2)).astype(jnp.float32)   # NCHW f32


# ------------------------- pure-JAX reference ------------------------------- #
def residual_conv_ref(x, params, sampling="down"):
    stride = 2 if sampling == "down" else 1
    conv = lambda a, w, s: jax.lax.conv_general_dilated(
        a, w, (s, s), ((1, 1), (1, 1)),
        dimension_numbers=("NCHW", "OIHW", "NCHW"))

    def bn(a, g, b, rm, rv):
        sc = g / jnp.sqrt(rv + BN_EPS)
        sh = b - rm * sc
        return a * sc[None, :, None, None] + sh[None, :, None, None]

    leaky = lambda a: jnp.where(a >= 0, a, LEAKY_SLOPE * a)
    h = leaky(bn(conv(x, params["w1"], stride),
                 params["g1"], params["b1"], params["rm1"], params["rv1"]))
    out = bn(conv(h, params["w2"], 1),
             params["g2"], params["b2"], params["rm2"], params["rv2"])
    res = bn(conv(x, params["wr"], stride),
             params["gr"], params["br"], params["rmr"], params["rvr"])
    return leaky(res + out)


# --------------------------------- main ------------------------------------- #
if __name__ == "__main__":
    key = jax.random.PRNGKey(0)
    Cin, Cout, N, H, W = 4, 8, 2, 16, 16

    ks = jax.random.split(key, 16)
    params = {
        "w1": 0.1 * jax.random.normal(ks[0], (Cout, Cin, 3, 3), jnp.float32),
        "w2": 0.1 * jax.random.normal(ks[1], (Cout, Cout, 3, 3), jnp.float32),
        "wr": 0.1 * jax.random.normal(ks[2], (Cout, Cin, 3, 3), jnp.float32),
        "g1": jax.random.uniform(ks[3], (Cout,), jnp.float32, 0.5, 1.5),
        "b1": 0.1 * jax.random.normal(ks[4], (Cout,), jnp.float32),
        "rm1": 0.1 * jax.random.normal(ks[5], (Cout,), jnp.float32),
        "rv1": jax.random.uniform(ks[6], (Cout,), jnp.float32, 0.5, 1.5),
        "g2": jax.random.uniform(ks[7], (Cout,), jnp.float32, 0.5, 1.5),
        "b2": 0.1 * jax.random.normal(ks[8], (Cout,), jnp.float32),
        "rm2": 0.1 * jax.random.normal(ks[9], (Cout,), jnp.float32),
        "rv2": jax.random.uniform(ks[10], (Cout,), jnp.float32, 0.5, 1.5),
        "gr": jax.random.uniform(ks[11], (Cout,), jnp.float32, 0.5, 1.5),
        "br": 0.1 * jax.random.normal(ks[12], (Cout,), jnp.float32),
        "rmr": 0.1 * jax.random.normal(ks[13], (Cout,), jnp.float32),
        "rvr": jax.random.uniform(ks[14], (Cout,), jnp.float32, 0.5, 1.5),
    }
    x = jax.random.normal(ks[15], (N, Cin, H, W), jnp.float32)

    y = jax.block_until_ready(residual_conv_forward(x, params, sampling="down"))
    y_ref = jax.block_until_ready(residual_conv_ref(x, params, "down"))

    assert y.shape == (N, Cout, H // 2, W // 2), y.shape
    # bf16 matmul operands / bf16 output (f32 accumulation) -> loose tolerance.
    assert jnp.allclose(y, y_ref, atol=5e-2, rtol=5e-2), \
        float(jnp.max(jnp.abs(y - y_ref)))
    print("KERNEL_OK")
</pallas_src>

<mosaic_0001>
module attributes {stable_mosaic.version = 11 : i64} {
  func.func @kernel(%arg0: i32, %arg1: memref<128x48xbf16, #tpu.memory_space<vmem>>, %arg2: memref<48x256xbf16, #tpu.memory_space<vmem>>, %arg3: memref<1x256xf32, #tpu.memory_space<vmem>>, %arg4: memref<1x256xf32, #tpu.memory_space<vmem>>, %arg5: memref<1152x128xbf16, #tpu.memory_space<vmem>>, %arg6: memref<1x128xf32, #tpu.memory_space<vmem>>, %arg7: memref<1x128xf32, #tpu.memory_space<vmem>>, %arg8: memref<128x128xbf16, #tpu.memory_space<vmem>>, %arg9: memref<2x10x10x128xf32, #tpu.memory_space<vmem>>, %arg10: memref<128x1152xbf16, #tpu.memory_space<vmem>>) attributes {dimension_semantics = [#tpu.dimension_semantics<parallel>], iteration_bounds = array<i64: 1>, scalar_prefetch = 0 : i64, scratch_operands = 2 : i64, tpu.core_type = #tpu.core_type<tc>, window_params = [{transform_indices = @transform_0, window_bounds = array<i64: 128, 48>}, {pipeline_mode = #tpu.pipeline_mode<synchronous>, transform_indices = @transform_1, window_bounds = array<i64: 48, 256>}, {pipeline_mode = #tpu.pipeline_mode<synchronous>, transform_indices = @transform_2, window_bounds = array<i64: 1, 256>}, {pipeline_mode = #tpu.pipeline_mode<synchronous>, transform_indices = @transform_3, window_bounds = array<i64: 1, 256>}, {pipeline_mode = #tpu.pipeline_mode<synchronous>, transform_indices = @transform_4, window_bounds = array<i64: 1152, 128>}, {pipeline_mode = #tpu.pipeline_mode<synchronous>, transform_indices = @transform_5, window_bounds = array<i64: 1, 128>}, {pipeline_mode = #tpu.pipeline_mode<synchronous>, transform_indices = @transform_6, window_bounds = array<i64: 1, 128>}, {transform_indices = @transform_7, window_bounds = array<i64: 128, 128>}]} {
    %c0 = arith.constant 0 : index
    %c0_0 = arith.constant 0 : index
    %0 = vector.load %arg1[%c0, %c0_0] : memref<128x48xbf16, #tpu.memory_space<vmem>>, vector<128x48xbf16>
    %c0_1 = arith.constant 0 : index
    %c0_2 = arith.constant 0 : index
    %1 = vector.load %arg2[%c0_1, %c0_2] : memref<48x256xbf16, #tpu.memory_space<vmem>>, vector<48x256xbf16>
    %cst = arith.constant dense<0.000000e+00> : vector<128x256xf32>
    %2 = tpu.matmul %0, %1, %cst {dimension_numbers = #tpu.dot_dimension_numbers<[1], [0], [0], [1], [0, 0, 1, 1], [], []>} : vector<128x48xbf16>, vector<48x256xbf16>, vector<128x256xf32> -> vector<128x256xf32>
    %c0_3 = arith.constant 0 : index
    %c0_4 = arith.constant 0 : index
    %3 = vector.load %arg3[%c0_3, %c0_4] : memref<1x256xf32, #tpu.memory_space<vmem>>, vector<1x256xf32>
    %4 = vector.broadcast %3 : vector<1x256xf32> to vector<128x256xf32>
    %5 = arith.mulf %2, %4 : vector<128x256xf32>
    %c0_5 = arith.constant 0 : index
    %c0_6 = arith.constant 0 : index
    %6 = vector.load %arg4[%c0_5, %c0_6] : memref<1x256xf32, #tpu.memory_space<vmem>>, vector<1x256xf32>
    %7 = vector.broadcast %6 : vector<1x256xf32> to vector<128x256xf32>
    %8 = arith.addf %5, %7 : vector<128x256xf32>
    %9 = vector.extract_strided_slice %8 {offsets = [0, 0], sizes = [128, 128], strides = [1, 1]} : vector<128x256xf32> to vector<128x128xf32>
    %cst_7 = arith.constant 0.000000e+00 : f32
    %10 = vector.broadcast %cst_7 : f32 to vector<128x128xf32>
    %11 = arith.cmpf oge, %9, %10 : vector<128x128xf32>
    %cst_8 = arith.constant 2.000000e-01 : f32
    %12 = vector.broadcast %cst_8 : f32 to vector<128x128xf32>
    %13 = arith.mulf %12, %9 : vector<128x128xf32>
    %14 = arith.select %11, %9, %13 : vector<128x128xi1>, vector<128x128xf32>
    %15 = vector.extract_strided_slice %8 {offsets = [0, 128], sizes = [128, 128], strides = [1, 1]} : vector<128x256xf32> to vector<128x128xf32>
    %cst_9 = arith.constant 0.000000e+00 : f32
    %16 = vector.broadcast %cst_9 : f32 to vector<2x10x10x128xf32>
    %c0_10 = arith.constant 0 : index
    %c0_11 = arith.constant 0 : index
    %c0_12 = arith.constant 0 : index
    %c0_13 = arith.constant 0 : index
    %17 = vector.load %arg9[%c0_10, %c0_11, %c0_12, %c0_13] : memref<2x10x10x128xf32, #tpu.memory_space<vmem>>, vector<2x10x10x128xf32>
    tpu.vector_store %arg9[%c0_10, %c0_11, %c0_12, %c0_13], %16 {strides = array<i32>} : memref<2x10x10x128xf32, #tpu.memory_space<vmem>>, vector<2x10x10x128xf32>,
    %18 = vector.shape_cast %14 : vector<128x128xf32> to vector<2x8x8x128xf32>
    %c0_14 = arith.constant 0 : index
    %c1 = arith.constant 1 : index
    %c1_15 = arith.constant 1 : index
    %c0_16 = arith.constant 0 : index
    %19 = vector.load %arg9[%c0_14, %c1, %c1_15, %c0_16] : memref<2x10x10x128xf32, #tpu.memory_space<vmem>>, vector<2x8x8x128xf32>
    tpu.vector_store %arg9[%c0_14, %c1, %c1_15, %c0_16], %18 {strides = array<i32>} : memref<2x10x10x128xf32, #tpu.memory_space<vmem>>, vector<2x8x8x128xf32>,
    %c0_17 = arith.constant 0 : index
    %c0_18 = arith.constant 0 : index
    %c0_19 = arith.constant 0 : index
    %c0_20 = arith.constant 0 : index
    %20 = vector.load %arg9[%c0_17, %c0_18, %c0_19, %c0_20] : memref<2x10x10x128xf32, #tpu.memory_space<vmem>>, vector<2x8x8x128xf32>
    %21 = vector.shape_cast %20 : vector<2x8x8x128xf32> to vector<128x128xf32>
    %22 = arith.truncf %21 : vector<128x128xf32> to vector<128x128xbf16>
    %c0_21 = arith.constant 0 : index
    %c0_22 = arith.constant 0 : index
    %23 = vector.load %arg10[%c0_21, %c0_22] : memref<128x1152xbf16, #tpu.memory_space<vmem>>, vector<128x128xbf16>
    tpu.vector_store %arg10[%c0_21, %c0_22], %22 {strides = array<i32>} : memref<128x1152xbf16, #tpu.memory_space<vmem>>, vector<128x128xbf16>,
    %c0_23 = arith.constant 0 : index
    %c0_24 = arith.constant 0 : index
    %c1_25 = arith.constant 1 : index
    %c0_26 = arith.constant 0 : index
    %24 = vector.load %arg9[%c0_23, %c0_24, %c1_25, %c0_26] : memref<2x10x10x128xf32, #tpu.memory_space<vmem>>, vector<2x8x8x128xf32>
    %25 = vector.shape_cast %24 : vector<2x8x8x128xf32> to vector<128x128xf32>
    %26 = arith.truncf %25 : vector<128x128xf32> to vector<128x128xbf16>
    %c0_27 = arith.constant 0 : index
    %c128 = arith.constant 128 : index
    %27 = vector.load %arg10[%c0_27, %c128] : memref<128x1152xbf16, #tpu.memory_space<vmem>>, vector<128x128xbf16>
    tpu.vector_store %arg10[%c0_27, %c128], %26 {strides = array<i32>} : memref<128x1152xbf16, #tpu.memory_space<vmem>>, vector<128x128xbf16>,
    %c0_28 = arith.constant 0 : index
    %c0_29 = arith.constant 0 : index
    %c2 = arith.constant 2 : index
    %c0_30 = arith.constant 0 : index
    %28 = vector.load %arg9[%c0_28, %c0_29, %c2, %c0_30] : memref<2x10x10x128xf32, #tpu.memory_space<vmem>>, vector<2x8x8x128xf32>
    %29 = vector.shape_cast %28 : vector<2x8x8x128xf32> to vector<128x128xf32>
    %30 = arith.truncf %29 : vector<128x128xf32> to vector<128x128xbf16>
    %c0_31 = arith.constant 0 : index
    %c256 = arith.constant 256 : index
    %31 = vector.load %arg10[%c0_31, %c256] : memref<128x1152xbf16, #tpu.memory_space<vmem>>, vector<128x128xbf16>
    tpu.vector_store %arg10[%c0_31, %c256], %30 {strides = array<i32>} : memref<128x1152xbf16, #tpu.memory_space<vmem>>, vector<128x128xbf16>,
    %c0_32 = arith.constant 0 : index
    %c1_33 = arith.constant 1 : index
    %c0_34 = arith.constant 0 : index
    %c0_35 = arith.constant 0 : index
    %32 = vector.load %arg9[%c0_32, %c1_33, %c0_34, %c0_35] : memref<2x10x10x128xf32, #tpu.memory_space<vmem>>, vector<2x8x8x128xf32>
    %33 = vector.shape_cast %32 : vector<2x8x8x128xf32> to vector<128x128xf32>
    %34 = arith.truncf %33 : vector<128x128xf32> to vector<128x128xbf16>
    %c0_36 = arith.constant 0 : index
    %c384 = arith.constant 384 : index
    %35 = vector.load %arg10[%c0_36, %c384] : memref<128x1152xbf16, #tpu.memory_space<vmem>>, vector<128x128xbf16>
    tpu.vector_store %arg10[%c0_36, %c384], %34 {strides = array<i32>} : memref<128x1152xbf16, #tpu.memory_space<vmem>>, vector<128x128xbf16>,
    %c0_37 = arith.constant 0 : index
    %c1_38 = arith.constant 1 : index
    %c1_39 = arith.constant 1 : index
    %c0_40 = arith.constant 0 : index
    %36 = vector.load %arg9[%c0_37, %c1_38, %c1_39, %c0_40] : memref<2x10x10x128xf32, #tpu.memory_space<vmem>>, vector<2x8x8x128xf32>
    %37 = vector.shape_cast %36 : vector<2x8x8x128xf32> to vector<128x128xf32>
    %38 = arith.truncf %37 : vector<128x128xf32> to vector<128x128xbf16>
    %c0_41 = arith.constant 0 : index
    %c512 = arith.constant 512 : index
    %39 = vector.load %arg10[%c0_41, %c512] : memref<128x1152xbf16, #tpu.memory_space<vmem>>, vector<128x128xbf16>
    tpu.vector_store %arg10[%c0_41, %c512], %38 {strides = array<i32>} : memref<128x1152xbf16, #tpu.memory_space<vmem>>, vector<128x128xbf16>,
    %c0_42 = arith.constant 0 : index
    %c1_43 = arith.constant 1 : index
    %c2_44 = arith.constant 2 : index
    %c0_45 = arith.constant 0 : index
    %40 = vector.load %arg9[%c0_42, %c1_43, %c2_44, %c0_45] : memref<2x10x10x128xf32, #tpu.memory_space<vmem>>, vector<2x8x8x128xf32>
    %41 = vector.shape_cast %40 : vector<2x8x8x128xf32> to vector<128x128xf32>
    %42 = arith.truncf %41 : vector<128x128xf32> to vector<128x128xbf16>
    %c0_46 = arith.constant 0 : index
    %c640 = arith.constant 640 : index
    %43 = vector.load %arg10[%c0_46, %c640] : memref<128x1152xbf16, #tpu.memory_space<vmem>>, vector<128x128xbf16>
    tpu.vector_store %arg10[%c0_46, %c640], %42 {strides = array<i32>} : memref<128x1152xbf16, #tpu.memory_space<vmem>>, vector<128x128xbf16>,
    %c0_47 = arith.constant 0 : index
    %c2_48 = arith.constant 2 : index
    %c0_49 = arith.constant 0 : index
    %c0_50 = arith.constant 0 : index
    %44 = vector.load %arg9[%c0_47, %c2_48, %c0_49, %c0_50] : memref<2x10x10x128xf32, #tpu.memory_space<vmem>>, vector<2x8x8x128xf32>
    %45 = vector.shape_cast %44 : vector<2x8x8x128xf32> to vector<128x128xf32>
    %46 = arith.truncf %45 : vector<128x128xf32> to vector<128x128xbf16>
    %c0_51 = arith.constant 0 : index
    %c768 = arith.constant 768 : index
    %47 = vector.load %arg10[%c0_51, %c768] : memref<128x1152xbf16, #tpu.memory_space<vmem>>, vector<128x128xbf16>
    tpu.vector_store %arg10[%c0_51, %c768], %46 {strides = array<i32>} : memref<128x1152xbf16, #tpu.memory_space<vmem>>, vector<128x128xbf16>,
    %c0_52 = arith.constant 0 : index
    %c2_53 = arith.constant 2 : index
    %c1_54 = arith.constant 1 : index
    %c0_55 = arith.constant 0 : index
    %48 = vector.load %arg9[%c0_52, %c2_53, %c1_54, %c0_55] : memref<2x10x10x128xf32, #tpu.memory_space<vmem>>, vector<2x8x8x128xf32>
    %49 = vector.shape_cast %48 : vector<2x8x8x128xf32> to vector<128x128xf32>
    %50 = arith.truncf %49 : vector<128x128xf32> to vector<128x128xbf16>
    %c0_56 = arith.constant 0 : index
    %c896 = arith.constant 896 : index
    %51 = vector.load %arg10[%c0_56, %c896] : memref<128x1152xbf16, #tpu.memory_space<vmem>>, vector<128x128xbf16>
    tpu.vector_store %arg10[%c0_56, %c896], %50 {strides = array<i32>} : memref<128x1152xbf16, #tpu.memory_space<vmem>>, vector<128x128xbf16>,
    %c0_57 = arith.constant 0 : index
    %c2_58 = arith.constant 2 : index
    %c2_59 = arith.constant 2 : index
    %c0_60 = arith.constant 0 : index
    %52 = vector.load %arg9[%c0_57, %c2_58, %c2_59, %c0_60] : memref<2x10x10x128xf32, #tpu.memory_space<vmem>>, vector<2x8x8x128xf32>
    %53 = vector.shape_cast %52 : vector<2x8x8x128xf32> to vector<128x128xf32>
    %54 = arith.truncf %53 : vector<128x128xf32> to vector<128x128xbf16>
    %c0_61 = arith.constant 0 : index
    %c1024 = arith.constant 1024 : index
    %55 = vector.load %arg10[%c0_61, %c1024] : memref<128x1152xbf16, #tpu.memory_space<vmem>>, vector<128x128xbf16>
    tpu.vector_store %arg10[%c0_61, %c1024], %54 {strides = array<i32>} : memref<128x1152xbf16, #tpu.memory_space<vmem>>, vector<128x128xbf16>,
    %c0_62 = arith.constant 0 : index
    %c0_63 = arith.constant 0 : index
    %56 = vector.load %arg10[%c0_62, %c0_63] : memref<128x1152xbf16, #tpu.memory_space<vmem>>, vector<128x1152xbf16>
    %c0_64 = arith.constant 0 : index
    %c0_65 = arith.constant 0 : index
    %57 = vector.load %arg5[%c0_64, %c0_65] : memref<1152x128xbf16, #tpu.memory_space<vmem>>, vector<1152x128xbf16>
    %cst_66 = arith.constant dense<0.000000e+00> : vector<128x128xf32>
    %58 = tpu.matmul %56, %57, %cst_66 {dimension_numbers = #tpu.dot_dimension_numbers<[1], [0], [0], [1], [0, 0, 1, 1], [], []>} : vector<128x1152xbf16>, vector<1152x128xbf16>, vector<128x128xf32> -> vector<128x128xf32>
    %c0_67 = arith.constant 0 : index
    %c0_68 = arith.constant 0 : index
    %59 = vector.load %arg6[%c0_67, %c0_68] : memref<1x128xf32, #tpu.memory_space<vmem>>, vector<1x128xf32>
    %60 = vector.broadcast %59 : vector<1x128xf32> to vector<128x128xf32>
    %61 = arith.mulf %58, %60 : vector<128x128xf32>
    %c0_69 = arith.constant 0 : index
    %c0_70 = arith.constant 0 : index
    %62 = vector.load %arg7[%c0_69, %c0_70] : memref<1x128xf32, #tpu.memory_space<vmem>>, vector<1x128xf32>
    %63 = vector.broadcast %62 : vector<1x128xf32> to vector<128x128xf32>
    %64 = arith.addf %61, %63 : vector<128x128xf32>
    %65 = arith.addf %64, %15 : vector<128x128xf32>
    %cst_71 = arith.constant 0.000000e+00 : f32
    %66 = vector.broadcast %cst_71 : f32 to vector<128x128xf32>
    %67 = arith.cmpf oge, %65, %66 : vector<128x128xf32>
    %cst_72 = arith.constant 2.000000e-01 : f32
    %68 = vector.broadcast %cst_72 : f32 to vector<128x128xf32>
    %69 = arith.mulf %68, %65 : vector<128x128xf32>
    %70 = arith.select %67, %65, %69 : vector<128x128xi1>, vector<128x128xf32>
    %71 = arith.truncf %70 : vector<128x128xf32> to vector<128x128xbf16>
    %c0_73 = arith.constant 0 : index
    %c0_74 = arith.constant 0 : index
    %72 = vector.load %arg8[%c0_73, %c0_74] : memref<128x128xbf16, #tpu.memory_space<vmem>>, vector<128x128xbf16>
    tpu.vector_store %arg8[%c0_73, %c0_74], %71 {strides = array<i32>} : memref<128x128xbf16, #tpu.memory_space<vmem>>, vector<128x128xbf16>,
    return
  }
  func.func @transform_0(%arg0: i32) -> (i32, i32) {
    %c0_i32 = arith.constant 0 : i32
    %c0_i32_0 = arith.constant 0 : i32
    return %arg0, %c0_i32 : i32, i32
  }
  func.func @transform_1(%arg0: i32) -> (i32, i32) {
    %c0_i32 = arith.constant 0 : i32
    %c0_i32_0 = arith.constant 0 : i32
    %c0_i32_1 = arith.constant 0 : i32
    return %c0_i32, %c0_i32_0 : i32, i32
  }
  func.func @transform_2(%arg0: i32) -> (i32, i32) {
    %c0_i32 = arith.constant 0 : i32
    %c0_i32_0 = arith.constant 0 : i32
    %c0_i32_1 = arith.constant 0 : i32
    return %c0_i32, %c0_i32_0 : i32, i32
  }
  func.func @transform_3(%arg0: i32) -> (i32, i32) {
    %c0_i32 = arith.constant 0 : i32
    %c0_i32_0 = arith.constant 0 : i32
    %c0_i32_1 = arith.constant 0 : i32
    return %c0_i32, %c0_i32_0 : i32, i32
  }
  func.func @transform_4(%arg0: i32) -> (i32, i32) {
    %c0_i32 = arith.constant 0 : i32
    %c0_i32_0 = arith.constant 0 : i32
    %c0_i32_1 = arith.constant 0 : i32
    return %c0_i32, %c0_i32_0 : i32, i32
  }
  func.func @transform_5(%arg0: i32) -> (i32, i32) {
    %c0_i32 = arith.constant 0 : i32
    %c0_i32_0 = arith.constant 0 : i32
    %c0_i32_1 = arith.constant 0 : i32
    return %c0_i32, %c0_i32_0 : i32, i32
  }
  func.func @transform_6(%arg0: i32) -> (i32, i32) {
    %c0_i32 = arith.constant 0 : i32
    %c0_i32_0 = arith.constant 0 : i32
    %c0_i32_1 = arith.constant 0 : i32
    return %c0_i32, %c0_i32_0 : i32, i32
  }
  func.func @transform_7(%arg0: i32) -> (i32, i32) {
    %c0_i32 = arith.constant 0 : i32
    %c0_i32_0 = arith.constant 0 : i32
    return %arg0, %c0_i32 : i32, i32
  }
}

</mosaic_0001>

<llo_original>
// kernel: residual_conv_forward.1
$region0: #{residual_conv_forward.1}
  #allocation0 [shape = 'u32[]', space=smem, size = 0x4, offset = 0x4, fixed_abs, tag = 'smem constant byte address 0x4 - core index']
  #allocation1 [shape = 'u32[144,128]{1,0:T(1,128)}', space=vmem, size = 0x12000, scoped, tag = 'internal scratch']
  #allocation2 [shape = 'f32[2,10,10,128]{3,2,1,0:T(8,128)}', space=vmem, size = 0x28000, scoped, tag = 'scratch operand']
  #allocation3 [shape = 'bf16[128,1152]{1,0:T(16,128)(2,1)}', space=vmem, size = 0x48000, scoped, tag = 'scratch operand']
  %s0 = inlined_call_operand.vmem [shape: bf16[128,48], index: 0, kind: input, shape index: {}]
  %s1 = inlined_call_operand.vmem [shape: bf16[48,256], index: 1, kind: input, shape index: {}]
  %s2 = inlined_call_operand.vmem [shape: f32[1,256], index: 2, kind: input, shape index: {}]
  %s3 = inlined_call_operand.vmem [shape: f32[1,256], index: 3, kind: input, shape index: {}]
  %s4 = inlined_call_operand.vmem [shape: bf16[1152,128], index: 4, kind: input, shape index: {}]
  %s5 = inlined_call_operand.vmem [shape: f32[1,128], index: 5, kind: input, shape index: {}]
  %s6 = inlined_call_operand.vmem [shape: f32[1,128], index: 6, kind: input, shape index: {}]
  %s7 = inlined_call_operand.vmem [shape: bf16[128,128], index: 7, kind: output, shape index: {}]
  %s8 = sld [smem:[#allocation0]]
  $region38: #{residual_conv_forward.1} parent=0
    _
  %s10 = ssub.s32 1, %s8
  %s11 = scalar_select 0, %s10, %s8
  // Predicated region
  $region2: #{residual_conv_forward.1} parent=0 // pred_check
    _
  $region3: #{residual_conv_forward.1} parent=0 // pred_check_branch
    %13 = sbr.rel (0) target = $region5
  $region4: #{residual_conv_forward.1} parent=0 // pred_region
    _
  $region5: #{residual_conv_forward.1} parent=0 // pred_fallthru
    _
  // Predicated region
  $region6: #{residual_conv_forward.1} parent=0 // pred_check
    _
  $region7: #{residual_conv_forward.1} parent=0 // pred_check_branch
    %15 = sbr.rel (0) target = $region9
  $region8: #{residual_conv_forward.1} parent=0 // pred_region
    _
  $region9: #{residual_conv_forward.1} parent=0 // pred_fallthru
    _
  // Predicated region
  $region10: #{residual_conv_forward.1} parent=0 // pred_check
    _
  $region11: #{residual_conv_forward.1} parent=0 // pred_check_branch
    %17 = sbr.rel (0) target = $region13
  $region12: #{residual_conv_forward.1} parent=0 // pred_region
    _
  $region13: #{residual_conv_forward.1} parent=0 // pred_fallthru
    _
  // Predicated region
  $region14: #{residual_conv_forward.1} parent=0 // pred_check
    _
  $region15: #{residual_conv_forward.1} parent=0 // pred_check_branch
    %19 = sbr.rel (0) target = $region17
  $region16: #{residual_conv_forward.1} parent=0 // pred_region
    _
  $region17: #{residual_conv_forward.1} parent=0 // pred_fallthru
    _
  // Predicated region
  $region18: #{residual_conv_forward.1} parent=0 // pred_check
    _
  $region19: #{residual_conv_forward.1} parent=0 // pred_check_branch
    %21 = sbr.rel (0) target = $region21
  $region20: #{residual_conv_forward.1} parent=0 // pred_region
    _
  $region21: #{residual_conv_forward.1} parent=0 // pred_fallthru
    _
  // Predicated region
  $region22: #{residual_conv_forward.1} parent=0 // pred_check
    _
  $region23: #{residual_conv_forward.1} parent=0 // pred_check_branch
    %23 = sbr.rel (0) target = $region25
  $region24: #{residual_conv_forward.1} parent=0 // pred_region
    _
  $region25: #{residual_conv_forward.1} parent=0 // pred_fallthru
    _
  // Predicated region
  $region26: #{residual_conv_forward.1} parent=0 // pred_check
    _
  $region27: #{residual_conv_forward.1} parent=0 // pred_check_branch
    %25 = sbr.rel (0) target = $region29
  $region28: #{residual_conv_forward.1} parent=0 // pred_region
    _
  $region29: #{residual_conv_forward.1} parent=0 // pred_fallthru
    _
  %v27 = vld [vmem:[%s0] sm:$0xf]
  %v28 = vld [vmem:[%s0 + $0x4] sm:$0xf]
  %v29 = vld [vmem:[%s0 + $0x8] sm:$0xf]
  %v30 = vld [vmem:[%s0 + $0xc] sm:$0xf]
  %v31 = vld [vmem:[%s0 + $0x10] sm:$0xf]
  %v32 = vld [vmem:[%s0 + $0x14] sm:$0xf]
  %v33 = vld [vmem:[%s0 + $0x18] sm:$0xf]
  %v34 = vld [vmem:[%s0 + $0x1c] sm:$0xf]
  %v35 = vld [vmem:[%s0 + $0x20] sm:$0xf]
  %v36 = vld [vmem:[%s0 + $0x24] sm:$0xf]
  %v37 = vld [vmem:[%s0 + $0x28] sm:$0xf]
  %v38 = vld [vmem:[%s0 + $0x2c] sm:$0xf]
  %v39 = vld [vmem:[%s0 + $0x30] sm:$0xf]
  %v40 = vld [vmem:[%s0 + $0x34] sm:$0xf]
  %v41 = vld [vmem:[%s0 + $0x38] sm:$0xf]
  %v42 = vld [vmem:[%s0 + $0x3c] sm:$0xf]
  %v43 = vld [vmem:[%s1] sm:$0xff]
  %v44 = vld [vmem:[%s1 + $0x8] sm:$0xff]
  %v45 = vld [vmem:[%s1 + $0x10] sm:$0xff]
  %v46 = vld [vmem:[%s1 + $0x18] sm:$0xff]
  %v47 = vld [vmem:[%s1 + $0x20] sm:$0xff]
  %v48 = vld [vmem:[%s1 + $0x28] sm:$0xff]
  %v65 = vunpack.c.l.b16 %v27
  %v66 = vunpack.c.l.b16 %v28
  %v67 = vunpack.c.l.b16 %v29
  %v68 = vunpack.c.l.b16 %v30
  %v69 = vunpack.c.l.b16 %v31
  %v70 = vunpack.c.l.b16 %v32
  %v71 = vunpack.c.l.b16 %v33
  %v72 = vunpack.c.l.b16 %v34
  %v73 = vunpack.c.l.b16 %v35
  %v74 = vunpack.c.l.b16 %v36
  %v75 = vunpack.c.l.b16 %v37
  %v76 = vunpack.c.l.b16 %v38
  %v77 = vunpack.c.l.b16 %v39
  %v78 = vunpack.c.l.b16 %v40
  %v79 = vunpack.c.l.b16 %v41
  %v80 = vunpack.c.l.b16 %v42
  %v81 = vpack.c.b16 %v66, %v65
  %v82 = vpack.c.b16 %v68, %v67
  %v83 = vpack.c.b16 %v70, %v69
  %v84 = vpack.c.b16 %v72, %v71
  %v85 = vpack.c.b16 %v74, %v73
  %v86 = vpack.c.b16 %v76, %v75
  %v87 = vpack.c.b16 %v78, %v77
  %v88 = vpack.c.b16 %v80, %v79
  %v95 = vunpack.c.l.b16 %v43
  %v96 = vunpack.c.h.b16 %v43
  %v97 = vunpack.c.l.b16 %v44
  %v98 = vunpack.c.h.b16 %v44
  %v99 = vunpack.c.l.b16 %v45
  %v100 = vunpack.c.h.b16 %v45
  %v101 = vunpack.c.l.b16 %v46
  %v102 = vunpack.c.h.b16 %v46
  %v103 = vunpack.c.l.b16 %v47
  %v104 = vunpack.c.h.b16 %v47
  %v105 = vunpack.c.l.b16 %v48
  %v106 = vunpack.c.h.b16 %v48
  %v107 = vpack.c.b16 %v97, %v95
  %v108 = vpack.c.b16 %v98, %v96
  %v109 = vpack.c.b16 %v101, %v99
  %v110 = vpack.c.b16 %v102, %v100
  %v111 = vpack.c.b16 %v105, %v103
  %v112 = vpack.c.b16 %v106, %v104
  %vm119 = vcmask 392192
  %v121 = vsel %vm119, %v81, 0
  %v124 = vsel %vm119, %v82, 0
  %v127 = vsel %vm119, %v83, 0
  %v130 = vsel %vm119, %v84, 0
  %v133 = vsel %vm119, %v85, 0
  %v136 = vsel %vm119, %v86, 0
  %v139 = vsel %vm119, %v87, 0
  %v142 = vsel %vm119, %v88, 0
  %144 = vmatprep.subr.bf16.mxu0 %v108
  %145 = vmatpush1.bf16.msra.mxu0 %v107
  %146 = vmatprep.subr.bf16.mxu0 %v110
  %147 = vmatpush1.bf16.msra.mxu0 %v109
  %148 = vmatprep.subr.bf16.mxu0 %v112
  %149 = vmatpush1.bf16.msra.mxu0 %v111
  %150 = vmatprep.subr.bf16.mxu0 0
  %151 = vmatpush1.bf16.msra.mxu0 0
  %152 = vmatprep.subr.bf16.mxu0 0
  %153 = vmatpush1.bf16.msra.mxu0 0
  %154 = vmatprep.subr.bf16.mxu0 0
  %155 = vmatpush1.bf16.msra.mxu0 0
  %156 = vmatprep.subr.bf16.mxu0 0
  %157 = vmatpush1.bf16.msra.mxu0 0
  %158 = vmatprep.subr.bf16.mxu0 0
  %159 = vmatpush1.bf16.msra.mxu0 0
  %160 = vmatprep.subr.bf16.mxu0 0
  %161 = vmatpush1.bf16.msra.mxu0 0
  %162 = vmatprep.subr.bf16.mxu0 0
  %163 = vmatpush1.bf16.msra.mxu0 0
  %164 = vmatprep.subr.bf16.mxu0 0
  %165 = vmatpush1.bf16.msra.mxu0 0
  %166 = vmatprep.subr.bf16.mxu0 0
  %167 = vmatpush1.bf16.msra.mxu0 0
  %168 = vmatprep.subr.bf16.mxu0 0
  %169 = vmatpush1.bf16.msra.mxu0 0
  %170 = vmatprep.subr.bf16.mxu0 0
  %171 = vmatpush1.bf16.msra.mxu0 0
  %172 = vmatprep.subr.bf16.mxu0 0
  %173 = vmatpush1.bf16.msra.mxu0 0
  %174 = vmatprep.subr.bf16.mxu0 0
  %175 = vmatpush1.bf16.msra.mxu0 0
  %176 = vmatprep.mubr.bf16.mxu0 0
  %177 = vmatmul.mubr.bf16.gmra.mrb[0].mxu0 %v121
  %v178 = vpop.f32.mrb[0].mxu0
  %v179 = vadd.f32 0.0, %v178
  %v180 = vpop.f32.mrb[0].mxu0
  %v181 = vadd.f32 0.0, %v180
  %v182 = vpop.f32.mrb[0].mxu0
  %v183 = vadd.f32 0.0, %v182
  %v184 = vpop.f32.mrb[0].mxu0
  %v185 = vadd.f32 0.0, %v184
  %186 = vmatprep.mubr.bf16.mxu0 0
  %187 = vmatmul.mubr.bf16.gmra.mrb[0].mxu0 %v124
  %v188 = vpop.f32.mrb[0].mxu0
  %v189 = vadd.f32 0.0, %v188
  %v190 = vpop.f32.mrb[0].mxu0
  %v191 = vadd.f32 0.0, %v190
  %v192 = vpop.f32.mrb[0].mxu0
  %v193 = vadd.f32 0.0, %v192
  %v194 = vpop.f32.mrb[0].mxu0
  %v195 = vadd.f32 0.0, %v194
  %196 = vmatprep.mubr.bf16.mxu0 0
  %197 = vmatmul.mubr.bf16.gmra.mrb[0].mxu0 %v127
  %v198 = vpop.f32.mrb[0].mxu0
  %v199 = vadd.f32 0.0, %v198
  %v200 = vpop.f32.mrb[0].mxu0
  %v201 = vadd.f32 0.0, %v200
  %v202 = vpop.f32.mrb[0].mxu0
  %v203 = vadd.f32 0.0, %v202
  %v204 = vpop.f32.mrb[0].mxu0
  %v205 = vadd.f32 0.0, %v204
  %206 = vmatprep.mubr.bf16.mxu0 0
  %207 = vmatmul.mubr.bf16.gmra.mrb[0].mxu0 %v130
  %v208 = vpop.f32.mrb[0].mxu0
  %v209 = vadd.f32 0.0, %v208
  %v210 = vpop.f32.mrb[0].mxu0
  %v211 = vadd.f32 0.0, %v210
  %v212 = vpop.f32.mrb[0].mxu0
  %v213 = vadd.f32 0.0, %v212
  %v214 = vpop.f32.mrb[0].mxu0
  %v215 = vadd.f32 0.0, %v214
  %216 = vmatprep.mubr.bf16.mxu0 0
  %217 = vmatmul.mubr.bf16.gmra.mrb[0].mxu0 %v133
  %v218 = vpop.f32.mrb[0].mxu0
  %v219 = vadd.f32 0.0, %v218
  %v220 = vpop.f32.mrb[0].mxu0
  %v221 = vadd.f32 0.0, %v220
  %v222 = vpop.f32.mrb[0].mxu0
  %v223 = vadd.f32 0.0, %v222
  %v224 = vpop.f32.mrb[0].mxu0
  %v225 = vadd.f32 0.0, %v224
  %226 = vmatprep.mubr.bf16.mxu0 0
  %227 = vmatmul.mubr.bf16.gmra.mrb[0].mxu0 %v136
  %v228 = vpop.f32.mrb[0].mxu0
  %v229 = vadd.f32 0.0, %v228
  %v230 = vpop.f32.mrb[0].mxu0
  %v231 = vadd.f32 0.0, %v230
  %v232 = vpop.f32.mrb[0].mxu0
  %v233 = vadd.f32 0.0, %v232
  %v234 = vpop.f32.mrb[0].mxu0
  %v235 = vadd.f32 0.0, %v234
  %236 = vmatprep.mubr.bf16.mxu0 0
  %237 = vmatmul.mubr.bf16.gmra.mrb[0].mxu0 %v139
  %v238 = vpop.f32.mrb[0].mxu0
  %v239 = vadd.f32 0.0, %v238
  %v240 = vpop.f32.mrb[0].mxu0
  %v241 = vadd.f32 0.0, %v240
  %v242 = vpop.f32.mrb[0].mxu0
  %v243 = vadd.f32 0.0, %v242
  %v244 = vpop.f32.mrb[0].mxu0
  %v245 = vadd.f32 0.0, %v244
  %246 = vmatprep.mubr.bf16.mxu0 0
  %247 = vmatmul.mubr.bf16.gmra.mrb[0].mxu0 %v142
  %v248 = vpop.f32.mrb[0].mxu0
  %v249 = vadd.f32 0.0, %v248
  %v250 = vpop.f32.mrb[0].mxu0
  %v251 = vadd.f32 0.0, %v250
  %v252 = vpop.f32.mrb[0].mxu0
  %v253 = vadd.f32 0.0, %v252
  %v254 = vpop.f32.mrb[0].mxu0
  %v255 = vadd.f32 0.0, %v254
  %256 = vdwg.mxu0
  %v257 = vld [vmem:[%s2] sm:$0x3]
  %v259 = vlaneseq
  %v260 = vshrl.u32 %v259, 7
  %v261 = vsub.s32 0, %v260
  %v262 = vrot.slane %v257, %v261
  %v263 = vlaneseq
  %v264 = vshrl.u32 %v263, 7
  %v265 = vsub.s32 1, %v264
  %v266 = vrot.slane %v257, %v265
  %v269 = vmul.f32 %v179, %v262
  %v270 = vmul.f32 %v181, %v266
  %v271 = vmul.f32 %v183, %v262
  %v272 = vmul.f32 %v185, %v266
  %v273 = vmul.f32 %v189, %v262
  %v274 = vmul.f32 %v191, %v266
  %v275 = vmul.f32 %v193, %v262
  %v276 = vmul.f32 %v195, %v266
  %v277 = vmul.f32 %v199, %v262
  %v278 = vmul.f32 %v201, %v266
  %v279 = vmul.f32 %v203, %v262
  %v280 = vmul.f32 %v205, %v266
  %v281 = vmul.f32 %v209, %v262
  %v282 = vmul.f32 %v211, %v266
  %v283 = vmul.f32 %v213, %v262
  %v284 = vmul.f32 %v215, %v266
  %v285 = vmul.f32 %v219, %v262
  %v286 = vmul.f32 %v221, %v266
  %v287 = vmul.f32 %v223, %v262
  %v288 = vmul.f32 %v225, %v266
  %v289 = vmul.f32 %v229, %v262
  %v290 = vmul.f32 %v231, %v266
  %v291 = vmul.f32 %v233, %v262
  %v292 = vmul.f32 %v235, %v266
  %v293 = vmul.f32 %v239, %v262
  %v294 = vmul.f32 %v241, %v266
  %v295 = vmul.f32 %v243, %v262
  %v296 = vmul.f32 %v245, %v266
  %v297 = vmul.f32 %v249, %v262
  %v298 = vmul.f32 %v251, %v266
  %v299 = vmul.f32 %v253, %v262
  %v300 = vmul.f32 %v255, %v266
  %v301 = vld [vmem:[%s3] sm:$0x3]
  %v303 = vlaneseq
  %v304 = vshrl.u32 %v303, 7
  %v305 = vsub.s32 0, %v304
  %v306 = vrot.slane %v301, %v305
  %v307 = vlaneseq
  %v308 = vshrl.u32 %v307, 7
  %v309 = vsub.s32 1, %v308
  %v310 = vrot.slane %v301, %v309
  %v313 = vadd.f32 %v269, %v306
  %v314 = vadd.f32 %v270, %v310
  %v315 = vadd.f32 %v271, %v306
  %v316 = vadd.f32 %v272, %v310
  %v317 = vadd.f32 %v273, %v306
  %v318 = vadd.f32 %v274, %v310
  %v319 = vadd.f32 %v275, %v306
  %v320 = vadd.f32 %v276, %v310
  %v321 = vadd.f32 %v277, %v306
  %v322 = vadd.f32 %v278, %v310
  %v323 = vadd.f32 %v279, %v306
  %v324 = vadd.f32 %v280, %v310
  %v325 = vadd.f32 %v281, %v306
  %v326 = vadd.f32 %v282, %v310
  %v327 = vadd.f32 %v283, %v306
  %v328 = vadd.f32 %v284, %v310
  %v329 = vadd.f32 %v285, %v306
  %v330 = vadd.f32 %v286, %v310
  %v331 = vadd.f32 %v287, %v306
  %v332 = vadd.f32 %v288, %v310
  %v333 = vadd.f32 %v289, %v306
  %v334 = vadd.f32 %v290, %v310
  %v335 = vadd.f32 %v291, %v306
  %v336 = vadd.f32 %v292, %v310
  %v337 = vadd.f32 %v293, %v306
  %v338 = vadd.f32 %v294, %v310
  %v339 = vadd.f32 %v295, %v306
  %v340 = vadd.f32 %v296, %v310
  %v341 = vadd.f32 %v297, %v306
  %v342 = vadd.f32 %v298, %v310
  %v343 = vadd.f32 %v299, %v306
  %v344 = vadd.f32 %v300, %v310
  %vm345 = vcmp.ge.f32.partialorder %v313, 0.0
  %vm346 = vcmp.ge.f32.partialorder %v315, 0.0
  %vm347 = vcmp.ge.f32.partialorder %v317, 0.0
  %vm348 = vcmp.ge.f32.partialorder %v319, 0.0
  %vm349 = vcmp.ge.f32.partialorder %v321, 0.0
  %vm350 = vcmp.ge.f32.partialorder %v323, 0.0
  %vm351 = vcmp.ge.f32.partialorder %v325, 0.0
  %vm352 = vcmp.ge.f32.partialorder %v327, 0.0
  %vm353 = vcmp.ge.f32.partialorder %v329, 0.0
  %vm354 = vcmp.ge.f32.partialorder %v331, 0.0
  %vm355 = vcmp.ge.f32.partialorder %v333, 0.0
  %vm356 = vcmp.ge.f32.partialorder %v335, 0.0
  %vm357 = vcmp.ge.f32.partialorder %v337, 0.0
  %vm358 = vcmp.ge.f32.partialorder %v339, 0.0
  %vm359 = vcmp.ge.f32.partialorder %v341, 0.0
  %vm360 = vcmp.ge.f32.partialorder %v343, 0.0
  %v361 = vmul.f32 %v313, 0.2
  %v362 = vmul.f32 %v315, 0.2
  %v363 = vmul.f32 %v317, 0.2
  %v364 = vmul.f32 %v319, 0.2
  %v365 = vmul.f32 %v321, 0.2
  %v366 = vmul.f32 %v323, 0.2
  %v367 = vmul.f32 %v325, 0.2
  %v368 = vmul.f32 %v327, 0.2
  %v369 = vmul.f32 %v329, 0.2
  %v370 = vmul.f32 %v331, 0.2
  %v371 = vmul.f32 %v333, 0.2
  %v372 = vmul.f32 %v335, 0.2
  %v373 = vmul.f32 %v337, 0.2
  %v374 = vmul.f32 %v339, 0.2
  %v375 = vmul.f32 %v341, 0.2
  %v376 = vmul.f32 %v343, 0.2
  %v377 = vsel %vm345, %v313, %v361
  %v378 = vsel %vm346, %v315, %v362
  %v379 = vsel %vm347, %v317, %v363
  %v380 = vsel %vm348, %v319, %v364
  %v381 = vsel %vm349, %v321, %v365
  %v382 = vsel %vm350, %v323, %v366
  %v383 = vsel %vm351, %v325, %v367
  %v384 = vsel %vm352, %v327, %v368
  %v385 = vsel %vm353, %v329, %v369
  %v386 = vsel %vm354, %v331, %v370
  %v387 = vsel %vm355, %v333, %v371
  %v388 = vsel %vm356, %v335, %v372
  %v389 = vsel %vm357, %v337, %v373
  %v390 = vsel %vm358, %v339, %v374
  %v391 = vsel %vm359, %v341, %v375
  %v392 = vsel %vm360, %v343, %v376
  %393 = vst [vmem:[#allocation2] sm:$0xff] 0.0
  %394 = vst [vmem:[#allocation2 + $0x8] sm:$0x3] 0.0
  %395 = vst [vmem:[#allocation2 + $0x10] sm:$0xff] 0.0
  %396 = vst [vmem:[#allocation2 + $0x18] sm:$0x3] 0.0
  %397 = vst [vmem:[#allocation2 + $0x20] sm:$0xff] 0.0
  %398 = vst [vmem:[#allocation2 + $0x28] sm:$0x3] 0.0
  %399 = vst [vmem:[#allocation2 + $0x30] sm:$0xff] 0.0
  %400 = vst [vmem:[#allocation2 + $0x38] sm:$0x3] 0.0
  %401 = vst [vmem:[#allocation2 + $0x40] sm:$0xff] 0.0
  %402 = vst [vmem:[#allocation2 + $0x48] sm:$0x3] 0.0
  %403 = vst [vmem:[#allocation2 + $0x50] sm:$0xff] 0.0
  %404 = vst [vmem:[#allocation2 + $0x58] sm:$0x3] 0.0
  %405 = vst [vmem:[#allocation2 + $0x60] sm:$0xff] 0.0
  %406 = vst [vmem:[#allocation2 + $0x68] sm:$0x3] 0.0
  %407 = vst [vmem:[#allocation2 + $0x70] sm:$0xff] 0.0
  %408 = vst [vmem:[#allocation2 + $0x78] sm:$0x3] 0.0
  %409 = vst [vmem:[#allocation2 + $0x80] sm:$0xff] 0.0
  %410 = vst [vmem:[#allocation2 + $0x88] sm:$0x3] 0.0
  %411 = vst [vmem:[#allocation2 + $0x90] sm:$0xff] 0.0
  %412 = vst [vmem:[#allocation2 + $0x98] sm:$0x3] 0.0
  %413 = vst [vmem:[#allocation2 + $0xa0] sm:$0xff] 0.0
  %414 = vst [vmem:[#allocation2 + $0xa8] sm:$0x3] 0.0
  %415 = vst [vmem:[#allocation2 + $0xb0] sm:$0xff] 0.0
  %416 = vst [vmem:[#allocation2 + $0xb8] sm:$0x3] 0.0
  %417 = vst [vmem:[#allocation2 + $0xc0] sm:$0xff] 0.0
  %418 = vst [vmem:[#allocation2 + $0xc8] sm:$0x3] 0.0
  %419 = vst [vmem:[#allocation2 + $0xd0] sm:$0xff] 0.0
  %420 = vst [vmem:[#allocation2 + $0xd8] sm:$0x3] 0.0
  %421 = vst [vmem:[#allocation2 + $0xe0] sm:$0xff] 0.0
  %422 = vst [vmem:[#allocation2 + $0xe8] sm:$0x3] 0.0
  %423 = vst [vmem:[#allocation2 + $0xf0] sm:$0xff] 0.0
  %424 = vst [vmem:[#allocation2 + $0xf8] sm:$0x3] 0.0
  %425 = vst [vmem:[#allocation2 + $0x100] sm:$0xff] 0.0
  %426 = vst [vmem:[#allocation2 + $0x108] sm:$0x3] 0.0
  %427 = vst [vmem:[#allocation2 + $0x110] sm:$0xff] 0.0
  %428 = vst [vmem:[#allocation2 + $0x118] sm:$0x3] 0.0
  %429 = vst [vmem:[#allocation2 + $0x120] sm:$0xff] 0.0
  %430 = vst [vmem:[#allocation2 + $0x128] sm:$0x3] 0.0
  %431 = vst [vmem:[#allocation2 + $0x130] sm:$0xff] 0.0
  %432 = vst [vmem:[#allocation2 + $0x138] sm:$0x3] 0.0
  %s433 = scalar_lea.vmem [#allocation2], 16
  %434 = vst [vmem:[%s433 + $0x1] sm:$0xff] %v377
  %435 = vst [vmem:[%s433 + $0x11] sm:$0xff] %v378
  %436 = vst [vmem:[%s433 + $0x21] sm:$0xff] %v379
  %437 = vst [vmem:[%s433 + $0x31] sm:$0xff] %v380
  %438 = vst [vmem:[%s433 + $0x41] sm:$0xff] %v381
  %439 = vst [vmem:[%s433 + $0x51] sm:$0xff] %v382
  %440 = vst [vmem:[%s433 + $0x61] sm:$0xff] %v383
  %441 = vst [vmem:[%s433 + $0x71] sm:$0xff] %v384
  %442 = vst [vmem:[%s433 + $0xa1] sm:$0xff] %v385
  %443 = vst [vmem:[%s433 + $0xb1] sm:$0xff] %v386
  %444 = vst [vmem:[%s433 + $0xc1] sm:$0xff] %v387
  %445 = vst [vmem:[%s433 + $0xd1] sm:$0xff] %v388
  %446 = vst [vmem:[%s433 + $0xe1] sm:$0xff] %v389
  %447 = vst [vmem:[%s433 + $0xf1] sm:$0xff] %v390
  %448 = vst [vmem:[%s433 + $0x101] sm:$0xff] %v391
  %449 = vst [vmem:[%s433 + $0x111] sm:$0xff] %v392
  %v450 = vld [vmem:[#allocation2] sm:$0xff]
  %v451 = vld [vmem:[#allocation2 + $0x10] sm:$0xff]
  %v452 = vld [vmem:[#allocation2 + $0x20] sm:$0xff]
  %v453 = vld [vmem:[#allocation2 + $0x30] sm:$0xff]
  %v454 = vld [vmem:[#allocation2 + $0x40] sm:$0xff]
  %v455 = vld [vmem:[#allocation2 + $0x50] sm:$0xff]
  %v456 = vld [vmem:[#allocation2 + $0x60] sm:$0xff]
  %v457 = vld [vmem:[#allocation2 + $0x70] sm:$0xff]
  %v458 = vld [vmem:[#allocation2 + $0xa0] sm:$0xff]
  %v459 = vld [vmem:[#allocation2 + $0xb0] sm:$0xff]
  %v460 = vld [vmem:[#allocation2 + $0xc0] sm:$0xff]
  %v461 = vld [vmem:[#allocation2 + $0xd0] sm:$0xff]
  %v462 = vld [vmem:[#allocation2 + $0xe0] sm:$0xff]
  %v463 = vld [vmem:[#allocation2 + $0xf0] sm:$0xff]
  %v464 = vld [vmem:[#allocation2 + $0x100] sm:$0xff]
  %v465 = vld [vmem:[#allocation2 + $0x110] sm:$0xff]
  %v466 = vpack.c.bf16 %v451, %v450
  %v467 = vpack.c.bf16 %v453, %v452
  %v468 = vpack.c.bf16 %v455, %v454
  %v469 = vpack.c.bf16 %v457, %v456
  %v470 = vpack.c.bf16 %v459, %v458
  %v471 = vpack.c.bf16 %v461, %v460
  %v472 = vpack.c.bf16 %v463, %v462
  %v473 = vpack.c.bf16 %v465, %v464
  %474 = vst [vmem:[#allocation3] sm:$0xff] %v466
  %475 = vst [vmem:[#allocation3 + $0x48] sm:$0xff] %v467
  %476 = vst [vmem:[#allocation3 + $0x90] sm:$0xff] %v468
  %477 = vst [vmem:[#allocation3 + $0xd8] sm:$0xff] %v469
  %478 = vst [vmem:[#allocation3 + $0x120] sm:$0xff] %v470
  %479 = vst [vmem:[#allocation3 + $0x168] sm:$0xff] %v471
  %480 = vst [vmem:[#allocation3 + $0x1b0] sm:$0xff] %v472
  %481 = vst [vmem:[#allocation3 + $0x1f8] sm:$0xff] %v473
  %v482 = vld [vmem:[#allocation2 + $0x1] sm:$0xff]
  %v483 = vld [vmem:[#allocation2 + $0x11] sm:$0xff]
  %v484 = vld [vmem:[#allocation2 + $0x21] sm:$0xff]
  %v485 = vld [vmem:[#allocation2 + $0x31] sm:$0xff]
  %v486 = vld [vmem:[#allocation2 + $0x41] sm:$0xff]
  %v487 = vld [vmem:[#allocation2 + $0x51] sm:$0xff]
  %v488 = vld [vmem:[#allocation2 + $0x61] sm:$0xff]
  %v489 = vld [vmem:[#allocation2 + $0x71] sm:$0xff]
  %v490 = vld [vmem:[#allocation2 + $0xa1] sm:$0xff]
  %v491 = vld [vmem:[#allocation2 + $0xb1] sm:$0xff]
  %v492 = vld [vmem:[#allocation2 + $0xc1] sm:$0xff]
  %v493 = vld [vmem:[#allocation2 + $0xd1] sm:$0xff]
  %v494 = vld [vmem:[#allocation2 + $0xe1] sm:$0xff]
  %v495 = vld [vmem:[#allocation2 + $0xf1] sm:$0xff]
  %v496 = vld [vmem:[#allocation2 + $0x101] sm:$0xff]
  %v497 = vld [vmem:[#allocation2 + $0x111] sm:$0xff]
  %v498 = vpack.c.bf16 %v483, %v482
  %v499 = vpack.c.bf16 %v485, %v484
  %v500 = vpack.c.bf16 %v487, %v486
  %v501 = vpack.c.bf16 %v489, %v488
  %v502 = vpack.c.bf16 %v491, %v490
  %v503 = vpack.c.bf16 %v493, %v492
  %v504 = vpack.c.bf16 %v495, %v494
  %v505 = vpack.c.bf16 %v497, %v496
  %506 = vst [vmem:[#allocation3 + $0x8] sm:$0xff] %v498
  %507 = vst [vmem:[#allocation3 + $0x50] sm:$0xff] %v499
  %508 = vst [vmem:[#allocation3 + $0x98] sm:$0xff] %v500
  %509 = vst [vmem:[#allocation3 + $0xe0] sm:$0xff] %v501
  %510 = vst [vmem:[#allocation3 + $0x128] sm:$0xff] %v502
  %511 = vst [vmem:[#allocation3 + $0x170] sm:$0xff] %v503
  %512 = vst [vmem:[#allocation3 + $0x1b8] sm:$0xff] %v504
  %513 = vst [vmem:[#allocation3 + $0x200] sm:$0xff] %v505
  %v514 = vld [vmem:[#allocation2 + $0x2] sm:$0xff]
  %v515 = vld [vmem:[#allocation2 + $0x12] sm:$0xff]
  %v516 = vld [vmem:[#allocation2 + $0x22] sm:$0xff]
  %v517 = vld [vmem:[#allocation2 + $0x32] sm:$0xff]
  %v518 = vld [vmem:[#allocation2 + $0x42] sm:$0xff]
  %v519 = vld [vmem:[#allocation2 + $0x52] sm:$0xff]
  %v520 = vld [vmem:[#allocation2 + $0x62] sm:$0xff]
  %v521 = vld [vmem:[#allocation2 + $0x72] sm:$0xff]
  %v522 = vld [vmem:[#allocation2 + $0xa2] sm:$0xff]
  %v523 = vld [vmem:[#allocation2 + $0xb2] sm:$0xff]
  %v524 = vld [vmem:[#allocation2 + $0xc2] sm:$0xff]
  %v525 = vld [vmem:[#allocation2 + $0xd2] sm:$0xff]
  %v526 = vld [vmem:[#allocation2 + $0xe2] sm:$0xff]
  %v527 = vld [vmem:[#allocation2 + $0xf2] sm:$0xff]
  %v528 = vld [vmem:[#allocation2 + $0x102] sm:$0xff]
  %v529 = vld [vmem:[#allocation2 + $0x112] sm:$0xff]
  %v530 = vpack.c.bf16 %v515, %v514
  %v531 = vpack.c.bf16 %v517, %v516
  %v532 = vpack.c.bf16 %v519, %v518
  %v533 = vpack.c.bf16 %v521, %v520
  %v534 = vpack.c.bf16 %v523, %v522
  %v535 = vpack.c.bf16 %v525, %v524
  %v536 = vpack.c.bf16 %v527, %v526
  %v537 = vpack.c.bf16 %v529, %v528
  %538 = vst [vmem:[#allocation3 + $0x10] sm:$0xff] %v530
  %539 = vst [vmem:[#allocation3 + $0x58] sm:$0xff] %v531
  %540 = vst [vmem:[#allocation3 + $0xa0] sm:$0xff] %v532
  %541 = vst [vmem:[#allocation3 + $0xe8] sm:$0xff] %v533
  %542 = vst [vmem:[#allocation3 + $0x130] sm:$0xff] %v534
  %543 = vst [vmem:[#allocation3 + $0x178] sm:$0xff] %v535
  %544 = vst [vmem:[#allocation3 + $0x1c0] sm:$0xff] %v536
  %545 = vst [vmem:[#allocation3 + $0x208] sm:$0xff] %v537
  %v546 = vld [vmem:[%s433] sm:$0xff]
  %v547 = vld [vmem:[%s433 + $0x10] sm:$0xff]
  %v548 = vld [vmem:[%s433 + $0x20] sm:$0xff]
  %v549 = vld [vmem:[%s433 + $0x30] sm:$0xff]
  %v550 = vld [vmem:[%s433 + $0x40] sm:$0xff]
  %v551 = vld [vmem:[%s433 + $0x50] sm:$0xff]
  %v552 = vld [vmem:[%s433 + $0x60] sm:$0xff]
  %v553 = vld [vmem:[%s433 + $0x70] sm:$0xff]
  %v554 = vld [vmem:[%s433 + $0xa0] sm:$0xff]
  %v555 = vld [vmem:[%s433 + $0xb0] sm:$0xff]
  %v556 = vld [vmem:[%s433 + $0xc0] sm:$0xff]
  %v557 = vld [vmem:[%s433 + $0xd0] sm:$0xff]
  %v558 = vld [vmem:[%s433 + $0xe0] sm:$0xff]
  %v559 = vld [vmem:[%s433 + $0xf0] sm:$0xff]
  %v560 = vld [vmem:[%s433 + $0x100] sm:$0xff]
  %v561 = vld [vmem:[%s433 + $0x110] sm:$0xff]
  %v562 = vpack.c.bf16 %v547, %v546
  %v563 = vpack.c.bf16 %v549, %v548
  %v564 = vpack.c.bf16 %v551, %v550
  %v565 = vpack.c.bf16 %v553, %v552
  %v566 = vpack.c.bf16 %v555, %v554
  %v567 = vpack.c.bf16 %v557, %v556
  %v568 = vpack.c.bf16 %v559, %v558
  %v569 = vpack.c.bf16 %v561, %v560
  %570 = vst [vmem:[#allocation3 + $0x18] sm:$0xff] %v562
  %571 = vst [vmem:[#allocation3 + $0x60] sm:$0xff] %v563
  %572 = vst [vmem:[#allocation3 + $0xa8] sm:$0xff] %v564
  %573 = vst [vmem:[#allocation3 + $0xf0] sm:$0xff] %v565
  %574 = vst [vmem:[#allocation3 + $0x138] sm:$0xff] %v566
  %575 = vst [vmem:[#allocation3 + $0x180] sm:$0xff] %v567
  %576 = vst [vmem:[#allocation3 + $0x1c8] sm:$0xff] %v568
  %577 = vst [vmem:[#allocation3 + $0x210] sm:$0xff] %v569
  %v578 = vld [vmem:[%s433 + $0x1] sm:$0xff]
  %v579 = vld [vmem:[%s433 + $0x11] sm:$0xff]
  %v580 = vld [vmem:[%s433 + $0x21] sm:$0xff]
  %v581 = vld [vmem:[%s433 + $0x31] sm:$0xff]
  %v582 = vld [vmem:[%s433 + $0x41] sm:$0xff]
  %v583 = vld [vmem:[%s433 + $0x51] sm:$0xff]
  %v584 = vld [vmem:[%s433 + $0x61] sm:$0xff]
  %v585 = vld [vmem:[%s433 + $0x71] sm:$0xff]
  %v586 = vld [vmem:[%s433 + $0xa1] sm:$0xff]
  %v587 = vld [vmem:[%s433 + $0xb1] sm:$0xff]
  %v588 = vld [vmem:[%s433 + $0xc1] sm:$0xff]
  %v589 = vld [vmem:[%s433 + $0xd1] sm:$0xff]
  %v590 = vld [vmem:[%s433 + $0xe1] sm:$0xff]
  %v591 = vld [vmem:[%s433 + $0xf1] sm:$0xff]
  %v592 = vld [vmem:[%s433 + $0x101] sm:$0xff]
  %v593 = vld [vmem:[%s433 + $0x111] sm:$0xff]
  %v594 = vpack.c.bf16 %v579, %v578
  %v595 = vpack.c.bf16 %v581, %v580
  %v596 = vpack.c.bf16 %v583, %v582
  %v597 = vpack.c.bf16 %v585, %v584
  %v598 = vpack.c.bf16 %v587, %v586
  %v599 = vpack.c.bf16 %v589, %v588
  %v600 = vpack.c.bf16 %v591, %v590
  %v601 = vpack.c.bf16 %v593, %v592
  %602 = vst [vmem:[#allocation3 + $0x20] sm:$0xff] %v594
  %603 = vst [vmem:[#allocation3 + $0x68] sm:$0xff] %v595
  %604 = vst [vmem:[#allocation3 + $0xb0] sm:$0xff] %v596
  %605 = vst [vmem:[#allocation3 + $0xf8] sm:$0xff] %v597
  %606 = vst [vmem:[#allocation3 + $0x140] sm:$0xff] %v598
  %607 = vst [vmem:[#allocation3 + $0x188] sm:$0xff] %v599
  %608 = vst [vmem:[#allocation3 + $0x1d0] sm:$0xff] %v600
  %609 = vst [vmem:[#allocation3 + $0x218] sm:$0xff] %v601
  %v610 = vld [vmem:[%s433 + $0x2] sm:$0xff]
  %v611 = vld [vmem:[%s433 + $0x12] sm:$0xff]
  %v612 = vld [vmem:[%s433 + $0x22] sm:$0xff]
  %v613 = vld [vmem:[%s433 + $0x32] sm:$0xff]
  %v614 = vld [vmem:[%s433 + $0x42] sm:$0xff]
  %v615 = vld [vmem:[%s433 + $0x52] sm:$0xff]
  %v616 = vld [vmem:[%s433 + $0x62] sm:$0xff]
  %v617 = vld [vmem:[%s433 + $0x72] sm:$0xff]
  %v618 = vld [vmem:[%s433 + $0xa2] sm:$0xff]
  %v619 = vld [vmem:[%s433 + $0xb2] sm:$0xff]
  %v620 = vld [vmem:[%s433 + $0xc2] sm:$0xff]
  %v621 = vld [vmem:[%s433 + $0xd2] sm:$0xff]
  %v622 = vld [vmem:[%s433 + $0xe2] sm:$0xff]
  %v623 = vld [vmem:[%s433 + $0xf2] sm:$0xff]
  %v624 = vld [vmem:[%s433 + $0x102] sm:$0xff]
  %v625 = vld [vmem:[%s433 + $0x112] sm:$0xff]
  %v626 = vpack.c.bf16 %v611, %v610
  %v627 = vpack.c.bf16 %v613, %v612
  %v628 = vpack.c.bf16 %v615, %v614
  %v629 = vpack.c.bf16 %v617, %v616
  %v630 = vpack.c.bf16 %v619, %v618
  %v631 = vpack.c.bf16 %v621, %v620
  %v632 = vpack.c.bf16 %v623, %v622
  %v633 = vpack.c.bf16 %v625, %v624
  %634 = vst [vmem:[#allocation3 + $0x28] sm:$0xff] %v626
  %635 = vst [vmem:[#allocation3 + $0x70] sm:$0xff] %v627
  %636 = vst [vmem:[#allocation3 + $0xb8] sm:$0xff] %v628
  %637 = vst [vmem:[#allocation3 + $0x100] sm:$0xff] %v629
  %638 = vst [vmem:[#allocation3 + $0x148] sm:$0xff] %v630
  %639 = vst [vmem:[#allocation3 + $0x190] sm:$0xff] %v631
  %640 = vst [vmem:[#allocation3 + $0x1d8] sm:$0xff] %v632
  %641 = vst [vmem:[#allocation3 + $0x220] sm:$0xff] %v633
  %s642 = scalar_lea.vmem [#allocation2], 32
  %v643 = vld [vmem:[%s642] sm:$0xff]
  %v644 = vld [vmem:[%s642 + $0x10] sm:$0xff]
  %v645 = vld [vmem:[%s642 + $0x20] sm:$0xff]
  %v646 = vld [vmem:[%s642 + $0x30] sm:$0xff]
  %v647 = vld [vmem:[%s642 + $0x40] sm:$0xff]
  %v648 = vld [vmem:[%s642 + $0x50] sm:$0xff]
  %v649 = vld [vmem:[%s642 + $0x60] sm:$0xff]
  %v650 = vld [vmem:[%s642 + $0x70] sm:$0xff]
  %v651 = vld [vmem:[%s642 + $0xa0] sm:$0xff]
  %v652 = vld [vmem:[%s642 + $0xb0] sm:$0xff]
  %v653 = vld [vmem:[%s642 + $0xc0] sm:$0xff]
  %v654 = vld [vmem:[%s642 + $0xd0] sm:$0xff]
  %v655 = vld [vmem:[%s642 + $0xe0] sm:$0xff]
  %v656 = vld [vmem:[%s642 + $0xf0] sm:$0xff]
  %v657 = vld [vmem:[%s642 + $0x100] sm:$0xff]
  %v658 = vld [vmem:[%s642 + $0x110] sm:$0xff]
  %v659 = vpack.c.bf16 %v644, %v643
  %v660 = vpack.c.bf16 %v646, %v645
  %v661 = vpack.c.bf16 %v648, %v647
  %v662 = vpack.c.bf16 %v650, %v649
  %v663 = vpack.c.bf16 %v652, %v651
  %v664 = vpack.c.bf16 %v654, %v653
  %v665 = vpack.c.bf16 %v656, %v655
  %v666 = vpack.c.bf16 %v658, %v657
  %667 = vst [vmem:[#allocation3 + $0x30] sm:$0xff] %v659
  %668 = vst [vmem:[#allocation3 + $0x78] sm:$0xff] %v660
  %669 = vst [vmem:[#allocation3 + $0xc0] sm:$0xff] %v661
  %670 = vst [vmem:[#allocation3 + $0x108] sm:$0xff] %v662
  %671 = vst [vmem:[#allocation3 + $0x150] sm:$0xff] %v663
  %672 = vst [vmem:[#allocation3 + $0x198] sm:$0xff] %v664
  %673 = vst [vmem:[#allocation3 + $0x1e0] sm:$0xff] %v665
  %674 = vst [vmem:[#allocation3 + $0x228] sm:$0xff] %v666
  %v675 = vld [vmem:[%s642 + $0x1] sm:$0xff]
  %v676 = vld [vmem:[%s642 + $0x11] sm:$0xff]
  %v677 = vld [vmem:[%s642 + $0x21] sm:$0xff]
  %v678 = vld [vmem:[%s642 + $0x31] sm:$0xff]
  %v679 = vld [vmem:[%s642 + $0x41] sm:$0xff]
  %v680 = vld [vmem:[%s642 + $0x51] sm:$0xff]
  %v681 = vld [vmem:[%s642 + $0x61] sm:$0xff]
  %v682 = vld [vmem:[%s642 + $0x71] sm:$0xff]
  %v683 = vld [vmem:[%s642 + $0xa1] sm:$0xff]
  %v684 = vld [vmem:[%s642 + $0xb1] sm:$0xff]
  %v685 = vld [vmem:[%s642 + $0xc1] sm:$0xff]
  %v686 = vld [vmem:[%s642 + $0xd1] sm:$0xff]
  %v687 = vld [vmem:[%s642 + $0xe1] sm:$0xff]
  %v688 = vld [vmem:[%s642 + $0xf1] sm:$0xff]
  %v689 = vld [vmem:[%s642 + $0x101] sm:$0xff]
  %v690 = vld [vmem:[%s642 + $0x111] sm:$0xff]
  %v691 = vpack.c.bf16 %v676, %v675
  %v692 = vpack.c.bf16 %v678, %v677
  %v693 = vpack.c.bf16 %v680, %v679
  %v694 = vpack.c.bf16 %v682, %v681
  %v695 = vpack.c.bf16 %v684, %v683
  %v696 = vpack.c.bf16 %v686, %v685
  %v697 = vpack.c.bf16 %v688, %v687
  %v698 = vpack.c.bf16 %v690, %v689
  %699 = vst [vmem:[#allocation3 + $0x38] sm:$0xff] %v691
  %700 = vst [vmem:[#allocation3 + $0x80] sm:$0xff] %v692
  %701 = vst [vmem:[#allocation3 + $0xc8] sm:$0xff] %v693
  %702 = vst [vmem:[#allocation3 + $0x110] sm:$0xff] %v694
  %703 = vst [vmem:[#allocation3 + $0x158] sm:$0xff] %v695
  %704 = vst [vmem:[#allocation3 + $0x1a0] sm:$0xff] %v696
  %705 = vst [vmem:[#allocation3 + $0x1e8] sm:$0xff] %v697
  %706 = vst [vmem:[#allocation3 + $0x230] sm:$0xff] %v698
  %v707 = vld [vmem:[%s642 + $0x2] sm:$0xff]
  %v708 = vld [vmem:[%s642 + $0x12] sm:$0xff]
  %v709 = vld [vmem:[%s642 + $0x22] sm:$0xff]
  %v710 = vld [vmem:[%s642 + $0x32] sm:$0xff]
  %v711 = vld [vmem:[%s642 + $0x42] sm:$0xff]
  %v712 = vld [vmem:[%s642 + $0x52] sm:$0xff]
  %v713 = vld [vmem:[%s642 + $0x62] sm:$0xff]
  %v714 = vld [vmem:[%s642 + $0x72] sm:$0xff]
  %v715 = vld [vmem:[%s642 + $0xa2] sm:$0xff]
  %v716 = vld [vmem:[%s642 + $0xb2] sm:$0xff]
  %v717 = vld [vmem:[%s642 + $0xc2] sm:$0xff]
  %v718 = vld [vmem:[%s642 + $0xd2] sm:$0xff]
  %v719 = vld [vmem:[%s642 + $0xe2] sm:$0xff]
  %v720 = vld [vmem:[%s642 + $0xf2] sm:$0xff]
  %v721 = vld [vmem:[%s642 + $0x102] sm:$0xff]
  %v722 = vld [vmem:[%s642 + $0x112] sm:$0xff]
  %v723 = vpack.c.bf16 %v708, %v707
  %v724 = vpack.c.bf16 %v710, %v709
  %v725 = vpack.c.bf16 %v712, %v711
  %v726 = vpack.c.bf16 %v714, %v713
  %v727 = vpack.c.bf16 %v716, %v715
  %v728 = vpack.c.bf16 %v718, %v717
  %v729 = vpack.c.bf16 %v720, %v719
  %v730 = vpack.c.bf16 %v722, %v721
  %731 = vst [vmem:[#allocation3 + $0x40] sm:$0xff] %v723
  %732 = vst [vmem:[#allocation3 + $0x88] sm:$0xff] %v724
  %733 = vst [vmem:[#allocation3 + $0xd0] sm:$0xff] %v725
  %734 = vst [vmem:[#allocation3 + $0x118] sm:$0xff] %v726
  %735 = vst [vmem:[#allocation3 + $0x160] sm:$0xff] %v727
  %736 = vst [vmem:[#allocation3 + $0x1a8] sm:$0xff] %v728
  %737 = vst [vmem:[#allocation3 + $0x1f0] sm:$0xff] %v729
  %738 = vst [vmem:[#allocation3 + $0x238] sm:$0xff] %v730
  %v739 = vld [vmem:[#allocation3] sm:$0xff]
  %v740 = vld [vmem:[#allocation3 + $0x8] sm:$0xff]
  %v741 = vld [vmem:[#allocation3 + $0x10] sm:$0xff]
  %v742 = vld [vmem:[#allocation3 + $0x18] sm:$0xff]
  %v743 = vld [vmem:[#allocation3 + $0x20] sm:$0xff]
  %v744 = vld [vmem:[#allocation3 + $0x28] sm:$0xff]
  %v745 = vld [vmem:[#allocation3 + $0x30] sm:$0xff]
  %v746 = vld [vmem:[#allocation3 + $0x38] sm:$0xff]
  %v747 = vld [vmem:[#allocation3 + $0x40] sm:$0xff]
  %v748 = vld [vmem:[#allocation3 + $0x48] sm:$0xff]
  %v749 = vld [vmem:[#allocation3 + $0x50] sm:$0xff]
  %v750 = vld [vmem:[#allocation3 + $0x58] sm:$0xff]
  %v751 = vld [vmem:[#allocation3 + $0x60] sm:$0xff]
  %v752 = vld [vmem:[#allocation3 + $0x68] sm:$0xff]
  %v753 = vld [vmem:[#allocation3 + $0x70] sm:$0xff]
  %v754 = vld [vmem:[#allocation3 + $0x78] sm:$0xff]
  %v755 = vld [vmem:[#allocation3 + $0x80] sm:$0xff]
  %v756 = vld [vmem:[#allocation3 + $0x88] sm:$0xff]
  %v757 = vld [vmem:[#allocation3 + $0x90] sm:$0xff]
  %v758 = vld [vmem:[#allocation3 + $0x98] sm:$0xff]
  %v759 = vld [vmem:[#allocation3 + $0xa0] sm:$0xff]
  %v760 = vld [vmem:[#allocation3 + $0xa8] sm:$0xff]
  %v761 = vld [vmem:[#allocation3 + $0xb0] sm:$0xff]
  %v762 = vld [vmem:[#allocation3 + $0xb8] sm:$0xff]
  %v763 = vld [vmem:[#allocation3 + $0xc0] sm:$0xff]
  %v764 = vld [vmem:[#allocation3 + $0xc8] sm:$0xff]
  %v765 = vld [vmem:[#allocation3 + $0xd0] sm:$0xff]
  %v766 = vld [vmem:[#allocation3 + $0xd8] sm:$0xff]
  %v767 = vld [vmem:[#allocation3 + $0xe0] sm:$0xff]
  %v768 = vld [vmem:[#allocation3 + $0xe8] sm:$0xff]
  %v769 = vld [vmem:[#allocation3 + $0xf0] sm:$0xff]
  %v770 = vld [vmem:[#allocation3 + $0xf8] sm:$0xff]
  %v771 = vld [vmem:[#allocation3 + $0x100] sm:$0xff]
  %v772 = vld [vmem:[#allocation3 + $0x108] sm:$0xff]
  %v773 = vld [vmem:[#allocation3 + $0x110] sm:$0xff]
  %v774 = vld [vmem:[#allocation3 + $0x118] sm:$0xff]
  %v775 = vld [vmem:[#allocation3 + $0x120] sm:$0xff]
  %v776 = vld [vmem:[#allocation3 + $0x128] sm:$0xff]
  %v777 = vld [vmem:[#allocation3 + $0x130] sm:$0xff]
  %v778 = vld [vmem:[#allocation3 + $0x138] sm:$0xff]
  %v779 = vld [vmem:[#allocation3 + $0x140] sm:$0xff]
  %v780 = vld [vmem:[#allocation3 + $0x148] sm:$0xff]
  %v781 = vld [vmem:[#allocation3 + $0x150] sm:$0xff]
  %v782 = vld [vmem:[#allocation3 + $0x158] sm:$0xff]
  %v783 = vld [vmem:[#allocation3 + $0x160] sm:$0xff]
  %v784 = vld [vmem:[#allocation3 + $0x168] sm:$0xff]
  %v785 = vld [vmem:[#allocation3 + $0x170] sm:$0xff]
  %v786 = vld [vmem:[#allocation3 + $0x178] sm:$0xff]
  %v787 = vld [vmem:[#allocation3 + $0x180] sm:$0xff]
  %v788 = vld [vmem:[#allocation3 + $0x188] sm:$0xff]
  %v789 = vld [vmem:[#allocation3 + $0x190] sm:$0xff]
  %v790 = vld [vmem:[#allocation3 + $0x198] sm:$0xff]
  %v791 = vld [vmem:[#allocation3 + $0x1a0] sm:$0xff]
  %v792 = vld [vmem:[#allocation3 + $0x1a8] sm:$0xff]
  %v793 = vld [vmem:[#allocation3 + $0x1b0] sm:$0xff]
  %v794 = vld [vmem:[#allocation3 + $0x1b8] sm:$0xff]
  %v795 = vld [vmem:[#allocation3 + $0x1c0] sm:$0xff]
  %v796 = vld [vmem:[#allocation3 + $0x1c8] sm:$0xff]
  %v797 = vld [vmem:[#allocation3 + $0x1d0] sm:$0xff]
  %v798 = vld [vmem:[#allocation3 + $0x1d8] sm:$0xff]
  %v799 = vld [vmem:[#allocation3 + $0x1e0] sm:$0xff]
  %v800 = vld [vmem:[#allocation3 + $0x1e8] sm:$0xff]
  %v801 = vld [vmem:[#allocation3 + $0x1f0] sm:$0xff]
  %v802 = vld [vmem:[#allocation3 + $0x1f8] sm:$0xff]
  %v803 = vld [vmem:[#allocation3 + $0x200] sm:$0xff]
  %v804 = vld [vmem:[#allocation3 + $0x208] sm:$0xff]
  %v805 = vld [vmem:[#allocation3 + $0x210] sm:$0xff]
  %v806 = vld [vmem:[#allocation3 + $0x218] sm:$0xff]
  %v807 = vld [vmem:[#allocation3 + $0x220] sm:$0xff]
  %v808 = vld [vmem:[#allocation3 + $0x228] sm:$0xff]
  %v809 = vld [vmem:[#allocation3 + $0x230] sm:$0xff]
  %v810 = vld [vmem:[#allocation3 + $0x238] sm:$0xff]
  %v811 = vld [vmem:[%s4] sm:$0xf]
  %v812 = vld [vmem:[%s4 + $0x4] sm:$0xf]
  %v813 = vld [vmem:[%s4 + $0x8] sm:$0xf]
  %v814 = vld [vmem:[%s4 + $0xc] sm:$0xf]
  %v815 = vld [vmem:[%s4 + $0x10] sm:$0xf]
  %v816 = vld [vmem:[%s4 + $0x14] sm:$0xf]
  %v817 = vld [vmem:[%s4 + $0x18] sm:$0xf]
  %v818 = vld [vmem:[%s4 + $0x1c] sm:$0xf]
  %v819 = vld [vmem:[%s4 + $0x20] sm:$0xf]
  %v820 = vld [vmem:[%s4 + $0x24] sm:$0xf]
  %v821 = vld [vmem:[%s4 + $0x28] sm:$0xf]
  %v822 = vld [vmem:[%s4 + $0x2c] sm:$0xf]
  %v823 = vld [vmem:[%s4 + $0x30] sm:$0xf]
  %v824 = vld [vmem:[%s4 + $0x34] sm:$0xf]
  %v825 = vld [vmem:[%s4 + $0x38] sm:$0xf]
  %v826 = vld [vmem:[%s4 + $0x3c] sm:$0xf]
  %v827 = vld [vmem:[%s4 + $0x40] sm:$0xf]
  %v828 = vld [vmem:[%s4 + $0x44] sm:$0xf]
  %v829 = vld [vmem:[%s4 + $0x48] sm:$0xf]
  %v830 = vld [vmem:[%s4 + $0x4c] sm:$0xf]
  %v831 = vld [vmem:[%s4 + $0x50] sm:$0xf]
  %v832 = vld [vmem:[%s4 + $0x54] sm:$0xf]
  %v833 = vld [vmem:[%s4 + $0x58] sm:$0xf]
  %v834 = vld [vmem:[%s4 + $0x5c] sm:$0xf]
  %v835 = vld [vmem:[%s4 + $0x60] sm:$0xf]
  %v836 = vld [vmem:[%s4 + $0x64] sm:$0xf]
  %v837 = vld [vmem:[%s4 + $0x68] sm:$0xf]
  %v838 = vld [vmem:[%s4 + $0x6c] sm:$0xf]
  %v839 = vld [vmem:[%s4 + $0x70] sm:$0xf]
  %v840 = vld [vmem:[%s4 + $0x74] sm:$0xf]
  %v841 = vld [vmem:[%s4 + $0x78] sm:$0xf]
  %v842 = vld [vmem:[%s4 + $0x7c] sm:$0xf]
  %v843 = vld [vmem:[%s4 + $0x80] sm:$0xf]
  %v844 = vld [vmem:[%s4 + $0x84] sm:$0xf]
  %v845 = vld [vmem:[%s4 + $0x88] sm:$0xf]
  %v846 = vld [vmem:[%s4 + $0x8c] sm:$0xf]
  %v847 = vld [vmem:[%s4 + $0x90] sm:$0xf]
  %v848 = vld [vmem:[%s4 + $0x94] sm:$0xf]
  %v849 = vld [vmem:[%s4 + $0x98] sm:$0xf]
  %v850 = vld [vmem:[%s4 + $0x9c] sm:$0xf]
  %v851 = vld [vmem:[%s4 + $0xa0] sm:$0xf]
  %v852 = vld [vmem:[%s4 + $0xa4] sm:$0xf]
  %v853 = vld [vmem:[%s4 + $0xa8] sm:$0xf]
  %v854 = vld [vmem:[%s4 + $0xac] sm:$0xf]
  %v855 = vld [vmem:[%s4 + $0xb0] sm:$0xf]
  %v856 = vld [vmem:[%s4 + $0xb4] sm:$0xf]
  %v857 = vld [vmem:[%s4 + $0xb8] sm:$0xf]
  %v858 = vld [vmem:[%s4 + $0xbc] sm:$0xf]
  %v859 = vld [vmem:[%s4 + $0xc0] sm:$0xf]
  %v860 = vld [vmem:[%s4 + $0xc4] sm:$0xf]
  %v861 = vld [vmem:[%s4 + $0xc8] sm:$0xf]
  %v862 = vld [vmem:[%s4 + $0xcc] sm:$0xf]
  %v863 = vld [vmem:[%s4 + $0xd0] sm:$0xf]
  %v864 = vld [vmem:[%s4 + $0xd4] sm:$0xf]
  %v865 = vld [vmem:[%s4 + $0xd8] sm:$0xf]
  %v866 = vld [vmem:[%s4 + $0xdc] sm:$0xf]
  %v867 = vld [vmem:[%s4 + $0xe0] sm:$0xf]
  %v868 = vld [vmem:[%s4 + $0xe4] sm:$0xf]
  %v869 = vld [vmem:[%s4 + $0xe8] sm:$0xf]
  %v870 = vld [vmem:[%s4 + $0xec] sm:$0xf]
  %v871 = vld [vmem:[%s4 + $0xf0] sm:$0xf]
  %v872 = vld [vmem:[%s4 + $0xf4] sm:$0xf]
  %v873 = vld [vmem:[%s4 + $0xf8] sm:$0xf]
  %v874 = vld [vmem:[%s4 + $0xfc] sm:$0xf]
  %v875 = vld [vmem:[%s4 + $0x100] sm:$0xf]
  %v876 = vld [vmem:[%s4 + $0x104] sm:$0xf]
  %v877 = vld [vmem:[%s4 + $0x108] sm:$0xf]
  %v878 = vld [vmem:[%s4 + $0x10c] sm:$0xf]
  %v879 = vld [vmem:[%s4 + $0x110] sm:$0xf]
  %v880 = vld [vmem:[%s4 + $0x114] sm:$0xf]
  %v881 = vld [vmem:[%s4 + $0x118] sm:$0xf]
  %v882 = vld [vmem:[%s4 + $0x11c] sm:$0xf]
  %v883 = vld [vmem:[%s4 + $0x120] sm:$0xf]
  %v884 = vld [vmem:[%s4 + $0x124] sm:$0xf]
  %v885 = vld [vmem:[%s4 + $0x128] sm:$0xf]
  %v886 = vld [vmem:[%s4 + $0x12c] sm:$0xf]
  %v887 = vld [vmem:[%s4 + $0x130] sm:$0xf]
  %v888 = vld [vmem:[%s4 + $0x134] sm:$0xf]
  %v889 = vld [vmem:[%s4 + $0x138] sm:$0xf]
  %v890 = vld [vmem:[%s4 + $0x13c] sm:$0xf]
  %v891 = vld [vmem:[%s4 + $0x140] sm:$0xf]
  %v892 = vld [vmem:[%s4 + $0x144] sm:$0xf]
  %v893 = vld [vmem:[%s4 + $0x148] sm:$0xf]
  %v894 = vld [vmem:[%s4 + $0x14c] sm:$0xf]
  %v895 = vld [vmem:[%s4 + $0x150] sm:$0xf]
  %v896 = vld [vmem:[%s4 + $0x154] sm:$0xf]
  %v897 = vld [vmem:[%s4 + $0x158] sm:$0xf]
  %v898 = vld [vmem:[%s4 + $0x15c] sm:$0xf]
  %v899 = vld [vmem:[%s4 + $0x160] sm:$0xf]
  %v900 = vld [vmem:[%s4 + $0x164] sm:$0xf]
  %v901 = vld [vmem:[%s4 + $0x168] sm:$0xf]
  %v902 = vld [vmem:[%s4 + $0x16c] sm:$0xf]
  %v903 = vld [vmem:[%s4 + $0x170] sm:$0xf]
  %v904 = vld [vmem:[%s4 + $0x174] sm:$0xf]
  %v905 = vld [vmem:[%s4 + $0x178] sm:$0xf]
  %v906 = vld [vmem:[%s4 + $0x17c] sm:$0xf]
  %v907 = vld [vmem:[%s4 + $0x180] sm:$0xf]
  %v908 = vld [vmem:[%s4 + $0x184] sm:$0xf]
  %v909 = vld [vmem:[%s4 + $0x188] sm:$0xf]
  %v910 = vld [vmem:[%s4 + $0x18c] sm:$0xf]
  %v911 = vld [vmem:[%s4 + $0x190] sm:$0xf]
  %v912 = vld [vmem:[%s4 + $0x194] sm:$0xf]
  %v913 = vld [vmem:[%s4 + $0x198] sm:$0xf]
  %v914 = vld [vmem:[%s4 + $0x19c] sm:$0xf]
  %v915 = vld [vmem:[%s4 + $0x1a0] sm:$0xf]
  %v916 = vld [vmem:[%s4 + $0x1a4] sm:$0xf]
  %v917 = vld [vmem:[%s4 + $0x1a8] sm:$0xf]
  %v918 = vld [vmem:[%s4 + $0x1ac] sm:$0xf]
  %v919 = vld [vmem:[%s4 + $0x1b0] sm:$0xf]
  %v920 = vld [vmem:[%s4 + $0x1b4] sm:$0xf]
  %v921 = vld [vmem:[%s4 + $0x1b8] sm:$0xf]
  %v922 = vld [vmem:[%s4 + $0x1bc] sm:$0xf]
  %v923 = vld [vmem:[%s4 + $0x1c0] sm:$0xf]
  %v924 = vld [vmem:[%s4 + $0x1c4] sm:$0xf]
  %v925 = vld [vmem:[%s4 + $0x1c8] sm:$0xf]
  %v926 = vld [vmem:[%s4 + $0x1cc] sm:$0xf]
  %v927 = vld [vmem:[%s4 + $0x1d0] sm:$0xf]
  %v928 = vld [vmem:[%s4 + $0x1d4] sm:$0xf]
  %v929 = vld [vmem:[%s4 + $0x1d8] sm:$0xf]
  %v930 = vld [vmem:[%s4 + $0x1dc] sm:$0xf]
  %v931 = vld [vmem:[%s4 + $0x1e0] sm:$0xf]
  %v932 = vld [vmem:[%s4 + $0x1e4] sm:$0xf]
  %v933 = vld [vmem:[%s4 + $0x1e8] sm:$0xf]
  %v934 = vld [vmem:[%s4 + $0x1ec] sm:$0xf]
  %v935 = vld [vmem:[%s4 + $0x1f0] sm:$0xf]
  %v936 = vld [vmem:[%s4 + $0x1f4] sm:$0xf]
  %v937 = vld [vmem:[%s4 + $0x1f8] sm:$0xf]
  %v938 = vld [vmem:[%s4 + $0x1fc] sm:$0xf]
  %v939 = vld [vmem:[%s4 + $0x200] sm:$0xf]
  %v940 = vld [vmem:[%s4 + $0x204] sm:$0xf]
  %v941 = vld [vmem:[%s4 + $0x208] sm:$0xf]
  %v942 = vld [vmem:[%s4 + $0x20c] sm:$0xf]
  %v943 = vld [vmem:[%s4 + $0x210] sm:$0xf]
  %v944 = vld [vmem:[%s4 + $0x214] sm:$0xf]
  %v945 = vld [vmem:[%s4 + $0x218] sm:$0xf]
  %v946 = vld [vmem:[%s4 + $0x21c] sm:$0xf]
  %v947 = vld [vmem:[%s4 + $0x220] sm:$0xf]
  %v948 = vld [vmem:[%s4 + $0x224] sm:$0xf]
  %v949 = vld [vmem:[%s4 + $0x228] sm:$0xf]
  %v950 = vld [vmem:[%s4 + $0x22c] sm:$0xf]
  %v951 = vld [vmem:[%s4 + $0x230] sm:$0xf]
  %v952 = vld [vmem:[%s4 + $0x234] sm:$0xf]
  %v953 = vld [vmem:[%s4 + $0x238] sm:$0xf]
  %v954 = vld [vmem:[%s4 + $0x23c] sm:$0xf]
  %v1099 = vunpack.c.l.b16 %v811
  %v1100 = vunpack.c.l.b16 %v812
  %v1101 = vunpack.c.l.b16 %v813
  %v1102 = vunpack.c.l.b16 %v814
  %v1103 = vunpack.c.l.b16 %v815
  %v1104 = vunpack.c.l.b16 %v816
  %v1105 = vunpack.c.l.b16 %v817
  %v1106 = vunpack.c.l.b16 %v818
  %v1107 = vunpack.c.l.b16 %v819
  %v1108 = vunpack.c.l.b16 %v820
  %v1109 = vunpack.c.l.b16 %v821
  %v1110 = vunpack.c.l.b16 %v822
  %v1111 = vunpack.c.l.b16 %v823
  %v1112 = vunpack.c.l.b16 %v824
  %v1113 = vunpack.c.l.b16 %v825
  %v1114 = vunpack.c.l.b16 %v826
  %v1115 = vunpack.c.l.b16 %v827
  %v1116 = vunpack.c.l.b16 %v828
  %v1117 = vunpack.c.l.b16 %v829
  %v1118 = vunpack.c.l.b16 %v830
  %v1119 = vunpack.c.l.b16 %v831
  %v1120 = vunpack.c.l.b16 %v832
  %v1121 = vunpack.c.l.b16 %v833
  %v1122 = vunpack.c.l.b16 %v834
  %v1123 = vunpack.c.l.b16 %v835
  %v1124 = vunpack.c.l.b16 %v836
  %v1125 = vunpack.c.l.b16 %v837
  %v1126 = vunpack.c.l.b16 %v838
  %v1127 = vunpack.c.l.b16 %v839
  %v1128 = vunpack.c.l.b16 %v840
  %v1129 = vunpack.c.l.b16 %v841
  %v1130 = vunpack.c.l.b16 %v842
  %v1131 = vunpack.c.l.b16 %v843
  %v1132 = vunpack.c.l.b16 %v844
  %v1133 = vunpack.c.l.b16 %v845
  %v1134 = vunpack.c.l.b16 %v846
  %v1135 = vunpack.c.l.b16 %v847
  %v1136 = vunpack.c.l.b16 %v848
  %v1137 = vunpack.c.l.b16 %v849
  %v1138 = vunpack.c.l.b16 %v850
  %v1139 = vunpack.c.l.b16 %v851
  %v1140 = vunpack.c.l.b16 %v852
  %v1141 = vunpack.c.l.b16 %v853
  %v1142 = vunpack.c.l.b16 %v854
  %v1143 = vunpack.c.l.b16 %v855
  %v1144 = vunpack.c.l.b16 %v856
  %v1145 = vunpack.c.l.b16 %v857
  %v1146 = vunpack.c.l.b16 %v858
  %v1147 = vunpack.c.l.b16 %v859
  %v1148 = vunpack.c.l.b16 %v860
  %v1149 = vunpack.c.l.b16 %v861
  %v1150 = vunpack.c.l.b16 %v862
  %v1151 = vunpack.c.l.b16 %v863
  %v1152 = vunpack.c.l.b16 %v864
  %v1153 = vunpack.c.l.b16 %v865
  %v1154 = vunpack.c.l.b16 %v866
  %v1155 = vunpack.c.l.b16 %v867
  %v1156 = vunpack.c.l.b16 %v868
  %v1157 = vunpack.c.l.b16 %v869
  %v1158 = vunpack.c.l.b16 %v870
  %v1159 = vunpack.c.l.b16 %v871
  %v1160 = vunpack.c.l.b16 %v872
  %v1161 = vunpack.c.l.b16 %v873
  %v1162 = vunpack.c.l.b16 %v874
  %v1163 = vunpack.c.l.b16 %v875
  %v1164 = vunpack.c.l.b16 %v876
  %v1165 = vunpack.c.l.b16 %v877
  %v1166 = vunpack.c.l.b16 %v878
  %v1167 = vunpack.c.l.b16 %v879
  %v1168 = vunpack.c.l.b16 %v880
  %v1169 = vunpack.c.l.b16 %v881
  %v1170 = vunpack.c.l.b16 %v882
  %v1171 = vunpack.c.l.b16 %v883
  %v1172 = vunpack.c.l.b16 %v884
  %v1173 = vunpack.c.l.b16 %v885
  %v1174 = vunpack.c.l.b16 %v886
  %v1175 = vunpack.c.l.b16 %v887
  %v1176 = vunpack.c.l.b16 %v888
  %v1177 = vunpack.c.l.b16 %v889
  %v1178 = vunpack.c.l.b16 %v890
  %v1179 = vunpack.c.l.b16 %v891
  %v1180 = vunpack.c.l.b16 %v892
  %v1181 = vunpack.c.l.b16 %v893
  %v1182 = vunpack.c.l.b16 %v894
  %v1183 = vunpack.c.l.b16 %v895
  %v1184 = vunpack.c.l.b16 %v896
  %v1185 = vunpack.c.l.b16 %v897
  %v1186 = vunpack.c.l.b16 %v898
  %v1187 = vunpack.c.l.b16 %v899
  %v1188 = vunpack.c.l.b16 %v900
  %v1189 = vunpack.c.l.b16 %v901
  %v1190 = vunpack.c.l.b16 %v902
  %v1191 = vunpack.c.l.b16 %v903
  %v1192 = vunpack.c.l.b16 %v904
  %v1193 = vunpack.c.l.b16 %v905
  %v1194 = vunpack.c.l.b16 %v906
  %v1195 = vunpack.c.l.b16 %v907
  %v1196 = vunpack.c.l.b16 %v908
  %v1197 = vunpack.c.l.b16 %v909
  %v1198 = vunpack.c.l.b16 %v910
  %v1199 = vunpack.c.l.b16 %v911
  %v1200 = vunpack.c.l.b16 %v912
  %v1201 = vunpack.c.l.b16 %v913
  %v1202 = vunpack.c.l.b16 %v914
  %v1203 = vunpack.c.l.b16 %v915
  %v1204 = vunpack.c.l.b16 %v916
  %v1205 = vunpack.c.l.b16 %v917
  %v1206 = vunpack.c.l.b16 %v918
  %v1207 = vunpack.c.l.b16 %v919
  %v1208 = vunpack.c.l.b16 %v920
  %v1209 = vunpack.c.l.b16 %v921
  %v1210 = vunpack.c.l.b16 %v922
  %v1211 = vunpack.c.l.b16 %v923
  %v1212 = vunpack.c.l.b16 %v924
  %v1213 = vunpack.c.l.b16 %v925
  %v1214 = vunpack.c.l.b16 %v926
  %v1215 = vunpack.c.l.b16 %v927
  %v1216 = vunpack.c.l.b16 %v928
  %v1217 = vunpack.c.l.b16 %v929
  %v1218 = vunpack.c.l.b16 %v930
  %v1219 = vunpack.c.l.b16 %v931
  %v1220 = vunpack.c.l.b16 %v932
  %v1221 = vunpack.c.l.b16 %v933
  %v1222 = vunpack.c.l.b16 %v934
  %v1223 = vunpack.c.l.b16 %v935
  %v1224 = vunpack.c.l.b16 %v936
  %v1225 = vunpack.c.l.b16 %v937
  %v1226 = vunpack.c.l.b16 %v938
  %v1227 = vunpack.c.l.b16 %v939
  %v1228 = vunpack.c.l.b16 %v940
  %v1229 = vunpack.c.l.b16 %v941
  %v1230 = vunpack.c.l.b16 %v942
  %v1231 = vunpack.c.l.b16 %v943
  %v1232 = vunpack.c.l.b16 %v944
  %v1233 = vunpack.c.l.b16 %v945
  %v1234 = vunpack.c.l.b16 %v946
  %v1235 = vunpack.c.l.b16 %v947
  %v1236 = vunpack.c.l.b16 %v948
  %v1237 = vunpack.c.l.b16 %v949
  %v1238 = vunpack.c.l.b16 %v950
  %v1239 = vunpack.c.l.b16 %v951
  %v1240 = vunpack.c.l.b16 %v952
  %v1241 = vunpack.c.l.b16 %v953
  %v1242 = vunpack.c.l.b16 %v954
  %v1243 = vpack.c.b16 %v1100, %v1099
  %v1244 = vpack.c.b16 %v1102, %v1101
  %v1245 = vpack.c.b16 %v1104, %v1103
  %v1246 = vpack.c.b16 %v1106, %v1105
  %v1247 = vpack.c.b16 %v1108, %v1107
  %v1248 = vpack.c.b16 %v1110, %v1109
  %v1249 = vpack.c.b16 %v1112, %v1111
  %v1250 = vpack.c.b16 %v1114, %v1113
  %v1251 = vpack.c.b16 %v1116, %v1115
  %v1252 = vpack.c.b16 %v1118, %v1117
  %v1253 = vpack.c.b16 %v1120, %v1119
  %v1254 = vpack.c.b16 %v1122, %v1121
  %v1255 = vpack.c.b16 %v1124, %v1123
  %v1256 = vpack.c.b16 %v1126, %v1125
  %v1257 = vpack.c.b16 %v1128, %v1127
  %v1258 = vpack.c.b16 %v1130, %v1129
  %v1259 = vpack.c.b16 %v1132, %v1131
  %v1260 = vpack.c.b16 %v1134, %v1133
  %v1261 = vpack.c.b16 %v1136, %v1135
  %v1262 = vpack.c.b16 %v1138, %v1137
  %v1263 = vpack.c.b16 %v1140, %v1139
  %v1264 = vpack.c.b16 %v1142, %v1141
  %v1265 = vpack.c.b16 %v1144, %v1143
  %v1266 = vpack.c.b16 %v1146, %v1145
  %v1267 = vpack.c.b16 %v1148, %v1147
  %v1268 = vpack.c.b16 %v1150, %v1149
  %v1269 = vpack.c.b16 %v1152, %v1151
  %v1270 = vpack.c.b16 %v1154, %v1153
  %v1271 = vpack.c.b16 %v1156, %v1155
  %v1272 = vpack.c.b16 %v1158, %v1157
  %v1273 = vpack.c.b16 %v1160, %v1159
  %v1274 = vpack.c.b16 %v1162, %v1161
  %v1275 = vpack.c.b16 %v1164, %v1163
  %v1276 = vpack.c.b16 %v1166, %v1165
  %v1277 = vpack.c.b16 %v1168, %v1167
  %v1278 = vpack.c.b16 %v1170, %v1169
  %v1279 = vpack.c.b16 %v1172, %v1171
  %v1280 = vpack.c.b16 %v1174, %v1173
  %v1281 = vpack.c.b16 %v1176, %v1175
  %v1282 = vpack.c.b16 %v1178, %v1177
  %v1283 = vpack.c.b16 %v1180, %v1179
  %v1284 = vpack.c.b16 %v1182, %v1181
  %v1285 = vpack.c.b16 %v1184, %v1183
  %v1286 = vpack.c.b16 %v1186, %v1185
  %v1287 = vpack.c.b16 %v1188, %v1187
  %v1288 = vpack.c.b16 %v1190, %v1189
  %v1289 = vpack.c.b16 %v1192, %v1191
  %v1290 = vpack.c.b16 %v1194, %v1193
  %v1291 = vpack.c.b16 %v1196, %v1195
  %v1292 = vpack.c.b16 %v1198, %v1197
  %v1293 = vpack.c.b16 %v1200, %v1199
  %v1294 = vpack.c.b16 %v1202, %v1201
  %v1295 = vpack.c.b16 %v1204, %v1203
  %v1296 = vpack.c.b16 %v1206, %v1205
  %v1297 = vpack.c.b16 %v1208, %v1207
  %v1298 = vpack.c.b16 %v1210, %v1209
  %v1299 = vpack.c.b16 %v1212, %v1211
  %v1300 = vpack.c.b16 %v1214, %v1213
  %v1301 = vpack.c.b16 %v1216, %v1215
  %v1302 = vpack.c.b16 %v1218, %v1217
  %v1303 = vpack.c.b16 %v1220, %v1219
  %v1304 = vpack.c.b16 %v1222, %v1221
  %v1305 = vpack.c.b16 %v1224, %v1223
  %v1306 = vpack.c.b16 %v1226, %v1225
  %v1307 = vpack.c.b16 %v1228, %v1227
  %v1308 = vpack.c.b16 %v1230, %v1229
  %v1309 = vpack.c.b16 %v1232, %v1231
  %v1310 = vpack.c.b16 %v1234, %v1233
  %v1311 = vpack.c.b16 %v1236, %v1235
  %v1312 = vpack.c.b16 %v1238, %v1237
  %v1313 = vpack.c.b16 %v1240, %v1239
  %v1314 = vpack.c.b16 %v1242, %v1241
  %1387 = vmatprep.subr.bf16.mxu0 0
  %1388 = vmatpush1.bf16.msra.mxu0 %v1243
  %1389 = vmatprep.subr.bf16.mxu0 0
  %1390 = vmatpush1.bf16.msra.mxu0 %v1244
  %1391 = vmatprep.subr.bf16.mxu0 0
  %1392 = vmatpush1.bf16.msra.mxu0 %v1245
  %1393 = vmatprep.subr.bf16.mxu0 0
  %1394 = vmatpush1.bf16.msra.mxu0 %v1246
  %1395 = vmatprep.subr.bf16.mxu0 0
  %1396 = vmatpush1.bf16.msra.mxu0 %v1247
  %1397 = vmatprep.subr.bf16.mxu0 0
  %1398 = vmatpush1.bf16.msra.mxu0 %v1248
  %1399 = vmatprep.subr.bf16.mxu0 0
  %1400 = vmatpush1.bf16.msra.mxu0 %v1249
  %1401 = vmatprep.subr.bf16.mxu0 0
  %1402 = vmatpush1.bf16.msra.mxu0 %v1250
  %1403 = vmatprep.subr.bf16.mxu0 0
  %1404 = vmatpush1.bf16.msra.mxu0 %v1251
  %1405 = vmatprep.subr.bf16.mxu0 0
  %1406 = vmatpush1.bf16.msra.mxu0 %v1252
  %1407 = vmatprep.subr.bf16.mxu0 0
  %1408 = vmatpush1.bf16.msra.mxu0 %v1253
  %1409 = vmatprep.subr.bf16.mxu0 0
  %1410 = vmatpush1.bf16.msra.mxu0 %v1254
  %1411 = vmatprep.subr.bf16.mxu0 0
  %1412 = vmatpush1.bf16.msra.mxu0 %v1255
  %1413 = vmatprep.subr.bf16.mxu0 0
  %1414 = vmatpush1.bf16.msra.mxu0 %v1256
  %1415 = vmatprep.subr.bf16.mxu0 0
  %1416 = vmatpush1.bf16.msra.mxu0 %v1257
  %1417 = vmatprep.subr.bf16.mxu0 0
  %1418 = vmatpush1.bf16.msra.mxu0 %v1258
  %1419 = vmatprep.mubr.bf16.mxu0 %v740
  %1420 = vmatmul.mubr.bf16.gmra.mrb[0].mxu0 %v739
  %v1421 = vpop.f32.mrb[0].mxu0
  %v1422 = vadd.f32 0.0, %v1421
  %v1423 = vpop.f32.mrb[0].mxu0
  %v1424 = vpop.f32.mrb[0].mxu0
  %v1425 = vadd.f32 0.0, %v1424
  %v1426 = vpop.f32.mrb[0].mxu0
  %1427 = vmatprep.mubr.bf16.mxu0 %v749
  %1428 = vmatmul.mubr.bf16.gmra.mrb[0].mxu0 %v748
  %v1429 = vpop.f32.mrb[0].mxu0
  %v1430 = vadd.f32 0.0, %v1429
  %v1431 = vpop.f32.mrb[0].mxu0
  %v1432 = vpop.f32.mrb[0].mxu0
  %v1433 = vadd.f32 0.0, %v1432
  %v1434 = vpop.f32.mrb[0].mxu0
  %1435 = vmatprep.mubr.bf16.mxu0 %v758
  %1436 = vmatmul.mubr.bf16.gmra.mrb[0].mxu0 %v757
  %v1437 = vpop.f32.mrb[0].mxu0
  %v1438 = vadd.f32 0.0, %v1437
  %v1439 = vpop.f32.mrb[0].mxu0
  %v1440 = vpop.f32.mrb[0].mxu0
  %v1441 = vadd.f32 0.0, %v1440
  %v1442 = vpop.f32.mrb[0].mxu0
  %1443 = vmatprep.mubr.bf16.mxu0 %v767
  %1444 = vmatmul.mubr.bf16.gmra.mrb[0].mxu0 %v766
  %v1445 = vpop.f32.mrb[0].mxu0
  %v1446 = vadd.f32 0.0, %v1445
  %v1447 = vpop.f32.mrb[0].mxu0
  %v1448 = vpop.f32.mrb[0].mxu0
  %v1449 = vadd.f32 0.0, %v1448
  %v1450 = vpop.f32.mrb[0].mxu0
  %1451 = vmatprep.mubr.bf16.mxu0 %v776
  %1452 = vmatmul.mubr.bf16.gmra.mrb[0].mxu0 %v775
  %v1453 = vpop.f32.mrb[0].mxu0
  %v1454 = vadd.f32 0.0, %v1453
  %v1455 = vpop.f32.mrb[0].mxu0
  %v1456 = vpop.f32.mrb[0].mxu0
  %v1457 = vadd.f32 0.0, %v1456
  %v1458 = vpop.f32.mrb[0].mxu0
  %1459 = vmatprep.mubr.bf16.mxu0 %v785
  %1460 = vmatmul.mubr.bf16.gmra.mrb[0].mxu0 %v784
  %v1461 = vpop.f32.mrb[0].mxu0
  %v1462 = vadd.f32 0.0, %v1461
  %v1463 = vpop.f32.mrb[0].mxu0
  %v1464 = vpop.f32.mrb[0].mxu0
  %v1465 = vadd.f32 0.0, %v1464
  %v1466 = vpop.f32.mrb[0].mxu0
  %1467 = vmatprep.mubr.bf16.mxu0 %v794
  %1468 = vmatmul.mubr.bf16.gmra.mrb[0].mxu0 %v793
  %v1469 = vpop.f32.mrb[0].mxu0
  %v1470 = vadd.f32 0.0, %v1469
  %v1471 = vpop.f32.mrb[0].mxu0
  %v1472 = vpop.f32.mrb[0].mxu0
  %v1473 = vadd.f32 0.0, %v1472
  %v1474 = vpop.f32.mrb[0].mxu0
  %1475 = vmatprep.mubr.bf16.mxu0 %v803
  %1476 = vmatmul.mubr.bf16.gmra.mrb[0].mxu0 %v802
  %v1477 = vpop.f32.mrb[0].mxu0
  %v1478 = vadd.f32 0.0, %v1477
  %v1479 = vpop.f32.mrb[0].mxu0
  %v1480 = vpop.f32.mrb[0].mxu0
  %v1481 = vadd.f32 0.0, %v1480
  %v1482 = vpop.f32.mrb[0].mxu0
  %1483 = vdwg.mxu0
  %1484 = vmatprep.subr.bf16.mxu0 0
  %1485 = vmatpush1.bf16.msra.mxu0 %v1259
  %1486 = vmatprep.subr.bf16.mxu0 0
  %1487 = vmatpush1.bf16.msra.mxu0 %v1260
  %1488 = vmatprep.subr.bf16.mxu0 0
  %1489 = vmatpush1.bf16.msra.mxu0 %v1261
  %1490 = vmatprep.subr.bf16.mxu0 0
  %1491 = vmatpush1.bf16.msra.mxu0 %v1262
  %1492 = vmatprep.subr.bf16.mxu0 0
  %1493 = vmatpush1.bf16.msra.mxu0 %v1263
  %1494 = vmatprep.subr.bf16.mxu0 0
  %1495 = vmatpush1.bf16.msra.mxu0 %v1264
  %1496 = vmatprep.subr.bf16.mxu0 0
  %1497 = vmatpush1.bf16.msra.mxu0 %v1265
  %1498 = vmatprep.subr.bf16.mxu0 0
  %1499 = vmatpush1.bf16.msra.mxu0 %v1266
  %1500 = vmatprep.subr.bf16.mxu0 0
  %1501 = vmatpush1.bf16.msra.mxu0 %v1267
  %1502 = vmatprep.subr.bf16.mxu0 0
  %1503 = vmatpush1.bf16.msra.mxu0 %v1268
  %1504 = vmatprep.subr.bf16.mxu0 0
  %1505 = vmatpush1.bf16.msra.mxu0 %v1269
  %1506 = vmatprep.subr.bf16.mxu0 0
  %1507 = vmatpush1.bf16.msra.mxu0 %v1270
  %1508 = vmatprep.subr.bf16.mxu0 0
  %1509 = vmatpush1.bf16.msra.mxu0 %v1271
  %1510 = vmatprep.subr.bf16.mxu0 0
  %1511 = vmatpush1.bf16.msra.mxu0 %v1272
  %1512 = vmatprep.subr.bf16.mxu0 0
  %1513 = vmatpush1.bf16.msra.mxu0 %v1273
  %1514 = vmatprep.subr.bf16.mxu0 0
  %1515 = vmatpush1.bf16.msra.mxu0 %v1274
  %1516 = vmatprep.mubr.bf16.mxu0 %v742
  %1517 = vmatmul.mubr.bf16.gmra.mrb[0].mxu0 %v741
  %v1518 = vpop.f32.mrb[0].mxu0
  %v1519 = vadd.f32 %v1422, %v1518
  %v1520 = vpop.f32.mrb[0].mxu0
  %v1521 = vpop.f32.mrb[0].mxu0
  %v1522 = vadd.f32 %v1425, %v1521
  %v1523 = vpop.f32.mrb[0].mxu0
  %1524 = vmatprep.mubr.bf16.mxu0 %v751
  %1525 = vmatmul.mubr.bf16.gmra.mrb[0].mxu0 %v750
  %v1526 = vpop.f32.mrb[0].mxu0
  %v1527 = vadd.f32 %v1430, %v1526
  %v1528 = vpop.f32.mrb[0].mxu0
  %v1529 = vpop.f32.mrb[0].mxu0
  %v1530 = vadd.f32 %v1433, %v1529
  %v1531 = vpop.f32.mrb[0].mxu0
  %1532 = vmatprep.mubr.bf16.mxu0 %v760
  %1533 = vmatmul.mubr.bf16.gmra.mrb[0].mxu0 %v759
  %v1534 = vpop.f32.mrb[0].mxu0
  %v1535 = vadd.f32 %v1438, %v1534
  %v1536 = vpop.f32.mrb[0].mxu0
  %v1537 = vpop.f32.mrb[0].mxu0
  %v1538 = vadd.f32 %v1441, %v1537
  %v1539 = vpop.f32.mrb[0].mxu0
  %1540 = vmatprep.mubr.bf16.mxu0 %v769
  %1541 = vmatmul.mubr.bf16.gmra.mrb[0].mxu0 %v768
  %v1542 = vpop.f32.mrb[0].mxu0
  %v1543 = vadd.f32 %v1446, %v1542
  %v1544 = vpop.f32.mrb[0].mxu0
  %v1545 = vpop.f32.mrb[0].mxu0
  %v1546 = vadd.f32 %v1449, %v1545
  %v1547 = vpop.f32.mrb[0].mxu0
  %1548 = vmatprep.mubr.bf16.mxu0 %v778
  %1549 = vmatmul.mubr.bf16.gmra.mrb[0].mxu0 %v777
  %v1550 = vpop.f32.mrb[0].mxu0
  %v1551 = vadd.f32 %v1454, %v1550
  %v1552 = vpop.f32.mrb[0].mxu0
  %v1553 = vpop.f32.mrb[0].mxu0
  %v1554 = vadd.f32 %v1457, %v1553
  %v1555 = vpop.f32.mrb[0].mxu0
  %1556 = vmatprep.mubr.bf16.mxu0 %v787
  %1557 = vmatmul.mubr.bf16.gmra.mrb[0].mxu0 %v786
  %v1558 = vpop.f32.mrb[0].mxu0
  %v1559 = vadd.f32 %v1462, %v1558
  %v1560 = vpop.f32.mrb[0].mxu0
  %v1561 = vpop.f32.mrb[0].mxu0
  %v1562 = vadd.f32 %v1465, %v1561
  %v1563 = vpop.f32.mrb[0].mxu0
  %1564 = vmatprep.mubr.bf16.mxu0 %v796
  %1565 = vmatmul.mubr.bf16.gmra.mrb[0].mxu0 %v795
  %v1566 = vpop.f32.mrb[0].mxu0
  %v1567 = vadd.f32 %v1470, %v1566
  %v1568 = vpop.f32.mrb[0].mxu0
  %v1569 = vpop.f32.mrb[0].mxu0
  %v1570 = vadd.f32 %v1473, %v1569
  %v1571 = vpop.f32.mrb[0].mxu0
  %1572 = vmatprep.mubr.bf16.mxu0 %v805
  %1573 = vmatmul.mubr.bf16.gmra.mrb[0].mxu0 %v804
  %v1574 = vpop.f32.mrb[0].mxu0
  %v1575 = vadd.f32 %v1478, %v1574
  %v1576 = vpop.f32.mrb[0].mxu0
  %v1577 = vpop.f32.mrb[0].mxu0
  %v1578 = vadd.f32 %v1481, %v1577
  %v1579 = vpop.f32.mrb[0].mxu0
  %1580 = vdwg.mxu0
  %1581 = vmatprep.subr.bf16.mxu0 0
  %1582 = vmatpush1.bf16.msra.mxu0 %v1275
  %1583 = vmatprep.subr.bf16.mxu0 0
  %1584 = vmatpush1.bf16.msra.mxu0 %v1276
  %1585 = vmatprep.subr.bf16.mxu0 0
  %1586 = vmatpush1.bf16.msra.mxu0 %v1277
  %1587 = vmatprep.subr.bf16.mxu0 0
  %1588 = vmatpush1.bf16.msra.mxu0 %v1278
  %1589 = vmatprep.subr.bf16.mxu0 0
  %1590 = vmatpush1.bf16.msra.mxu0 %v1279
  %1591 = vmatprep.subr.bf16.mxu0 0
  %1592 = vmatpush1.bf16.msra.mxu0 %v1280
  %1593 = vmatprep.subr.bf16.mxu0 0
  %1594 = vmatpush1.bf16.msra.mxu0 %v1281
  %1595 = vmatprep.subr.bf16.mxu0 0
  %1596 = vmatpush1.bf16.msra.mxu0 %v1282
  %1597 = vmatprep.subr.bf16.mxu0 0
  %1598 = vmatpush1.bf16.msra.mxu0 %v1283
  %1599 = vmatprep.subr.bf16.mxu0 0
  %1600 = vmatpush1.bf16.msra.mxu0 %v1284
  %1601 = vmatprep.subr.bf16.mxu0 0
  %1602 = vmatpush1.bf16.msra.mxu0 %v1285
  %1603 = vmatprep.subr.bf16.mxu0 0
  %1604 = vmatpush1.bf16.msra.mxu0 %v1286
  %1605 = vmatprep.subr.bf16.mxu0 0
  %1606 = vmatpush1.bf16.msra.mxu0 %v1287
  %1607 = vmatprep.subr.bf16.mxu0 0
  %1608 = vmatpush1.bf16.msra.mxu0 %v1288
  %1609 = vmatprep.subr.bf16.mxu0 0
  %1610 = vmatpush1.bf16.msra.mxu0 %v1289
  %1611 = vmatprep.subr.bf16.mxu0 0
  %1612 = vmatpush1.bf16.msra.mxu0 %v1290
  %1613 = vmatprep.mubr.bf16.mxu0 %v744
  %1614 = vmatmul.mubr.bf16.gmra.mrb[0].mxu0 %v743
  %v1615 = vpop.f32.mrb[0].mxu0
  %v1616 = vadd.f32 %v1519, %v1615
  %v1617 = vpop.f32.mrb[0].mxu0
  %v1618 = vpop.f32.mrb[0].mxu0
  %v1619 = vadd.f32 %v1522, %v1618
  %v1620 = vpop.f32.mrb[0].mxu0
  %1621 = vmatprep.mubr.bf16.mxu0 %v753
  %1622 = vmatmul.mubr.bf16.gmra.mrb[0].mxu0 %v752
  %v1623 = vpop.f32.mrb[0].mxu0
  %v1624 = vadd.f32 %v1527, %v1623
  %v1625 = vpop.f32.mrb[0].mxu0
  %v1626 = vpop.f32.mrb[0].mxu0
  %v1627 = vadd.f32 %v1530, %v1626
  %v1628 = vpop.f32.mrb[0].mxu0
  %1629 = vmatprep.mubr.bf16.mxu0 %v762
  %1630 = vmatmul.mubr.bf16.gmra.mrb[0].mxu0 %v761
  %v1631 = vpop.f32.mrb[0].mxu0
  %v1632 = vadd.f32 %v1535, %v1631
  %v1633 = vpop.f32.mrb[0].mxu0
  %v1634 = vpop.f32.mrb[0].mxu0
  %v1635 = vadd.f32 %v1538, %v1634
  %v1636 = vpop.f32.mrb[0].mxu0
  %1637 = vmatprep.mubr.bf16.mxu0 %v771
  %1638 = vmatmul.mubr.bf16.gmra.mrb[0].mxu0 %v770
  %v1639 = vpop.f32.mrb[0].mxu0
  %v1640 = vadd.f32 %v1543, %v1639
  %v1641 = vpop.f32.mrb[0].mxu0
  %v1642 = vpop.f32.mrb[0].mxu0
  %v1643 = vadd.f32 %v1546, %v1642
  %v1644 = vpop.f32.mrb[0].mxu0
  %1645 = vmatprep.mubr.bf16.mxu0 %v780
  %1646 = vmatmul.mubr.bf16.gmra.mrb[0].mxu0 %v779
  %v1647 = vpop.f32.mrb[0].mxu0
  %v1648 = vadd.f32 %v1551, %v1647
  %v1649 = vpop.f32.mrb[0].mxu0
  %v1650 = vpop.f32.mrb[0].mxu0
  %v1651 = vadd.f32 %v1554, %v1650
  %v1652 = vpop.f32.mrb[0].mxu0
  %1653 = vmatprep.mubr.bf16.mxu0 %v789
  %1654 = vmatmul.mubr.bf16.gmra.mrb[0].mxu0 %v788
  %v1655 = vpop.f32.mrb[0].mxu0
  %v1656 = vadd.f32 %v1559, %v1655
  %v1657 = vpop.f32.mrb[0].mxu0
  %v1658 = vpop.f32.mrb[0].mxu0
  %v1659 = vadd.f32 %v1562, %v1658
  %v1660 = vpop.f32.mrb[0].mxu0
  %1661 = vmatprep.mubr.bf16.mxu0 %v798
  %1662 = vmatmul.mubr.bf16.gmra.mrb[0].mxu0 %v797
  %v1663 = vpop.f32.mrb[0].mxu0
  %v1664 = vadd.f32 %v1567, %v1663
  %v1665 = vpop.f32.mrb[0].mxu0
  %v1666 = vpop.f32.mrb[0].mxu0
  %v1667 = vadd.f32 %v1570, %v1666
  %v1668 = vpop.f32.mrb[0].mxu0
  %1669 = vmatprep.mubr.bf16.mxu0 %v807
  %1670 = vmatmul.mubr.bf16.gmra.mrb[0].mxu0 %v806
  %v1671 = vpop.f32.mrb[0].mxu0
  %v1672 = vadd.f32 %v1575, %v1671
  %v1673 = vpop.f32.mrb[0].mxu0
  %v1674 = vpop.f32.mrb[0].mxu0
  %v1675 = vadd.f32 %v1578, %v1674
  %v1676 = vpop.f32.mrb[0].mxu0
  %1677 = vdwg.mxu0
  %1678 = vmatprep.subr.bf16.mxu0 0
  %1679 = vmatpush1.bf16.msra.mxu0 %v1291
  %1680 = vmatprep.subr.bf16.mxu0 0
  %1681 = vmatpush1.bf16.msra.mxu0 %v1292
  %1682 = vmatprep.subr.bf16.mxu0 0
  %1683 = vmatpush1.bf16.msra.mxu0 %v1293
  %1684 = vmatprep.subr.bf16.mxu0 0
  %1685 = vmatpush1.bf16.msra.mxu0 %v1294
  %1686 = vmatprep.subr.bf16.mxu0 0
  %1687 = vmatpush1.bf16.msra.mxu0 %v1295
  %1688 = vmatprep.subr.bf16.mxu0 0
  %1689 = vmatpush1.bf16.msra.mxu0 %v1296
  %1690 = vmatprep.subr.bf16.mxu0 0
  %1691 = vmatpush1.bf16.msra.mxu0 %v1297
  %1692 = vmatprep.subr.bf16.mxu0 0
  %1693 = vmatpush1.bf16.msra.mxu0 %v1298
  %1694 = vmatprep.subr.bf16.mxu0 0
  %1695 = vmatpush1.bf16.msra.mxu0 %v1299
  %1696 = vmatprep.subr.bf16.mxu0 0
  %1697 = vmatpush1.bf16.msra.mxu0 %v1300
  %1698 = vmatprep.subr.bf16.mxu0 0
  %1699 = vmatpush1.bf16.msra.mxu0 %v1301
  %1700 = vmatprep.subr.bf16.mxu0 0
  %1701 = vmatpush1.bf16.msra.mxu0 %v1302
  %1702 = vmatprep.subr.bf16.mxu0 0
  %1703 = vmatpush1.bf16.msra.mxu0 %v1303
  %1704 = vmatprep.subr.bf16.mxu0 0
  %1705 = vmatpush1.bf16.msra.mxu0 %v1304
  %1706 = vmatprep.subr.bf16.mxu0 0
  %1707 = vmatpush1.bf16.msra.mxu0 %v1305
  %1708 = vmatprep.subr.bf16.mxu0 0
  %1709 = vmatpush1.bf16.msra.mxu0 %v1306
  %1710 = vmatprep.mubr.bf16.mxu0 %v746
  %1711 = vmatmul.mubr.bf16.gmra.mrb[0].mxu0 %v745
  %v1712 = vpop.f32.mrb[0].mxu0
  %v1713 = vadd.f32 %v1616, %v1712
  %v1714 = vpop.f32.mrb[0].mxu0
  %v1715 = vpop.f32.mrb[0].mxu0
  %v1716 = vadd.f32 %v1619, %v1715
  %v1717 = vpop.f32.mrb[0].mxu0
  %1718 = vmatprep.mubr.bf16.mxu0 %v755
  %1719 = vmatmul.mubr.bf16.gmra.mrb[0].mxu0 %v754
  %v1720 = vpop.f32.mrb[0].mxu0
  %v1721 = vadd.f32 %v1624, %v1720
  %v1722 = vpop.f32.mrb[0].mxu0
  %v1723 = vpop.f32.mrb[0].mxu0
  %v1724 = vadd.f32 %v1627, %v1723
  %v1725 = vpop.f32.mrb[0].mxu0
  %1726 = vmatprep.mubr.bf16.mxu0 %v764
  %1727 = vmatmul.mubr.bf16.gmra.mrb[0].mxu0 %v763
  %v1728 = vpop.f32.mrb[0].mxu0
  %v1729 = vadd.f32 %v1632, %v1728
  %v1730 = vpop.f32.mrb[0].mxu0
  %v1731 = vpop.f32.mrb[0].mxu0
  %v1732 = vadd.f32 %v1635, %v1731
  %v1733 = vpop.f32.mrb[0].mxu0
  %1734 = vmatprep.mubr.bf16.mxu0 %v773
  %1735 = vmatmul.mubr.bf16.gmra.mrb[0].mxu0 %v772
  %v1736 = vpop.f32.mrb[0].mxu0
  %v1737 = vadd.f32 %v1640, %v1736
  %v1738 = vpop.f32.mrb[0].mxu0
  %v1739 = vpop.f32.mrb[0].mxu0
  %v1740 = vadd.f32 %v1643, %v1739
  %v1741 = vpop.f32.mrb[0].mxu0
  %1742 = vmatprep.mubr.bf16.mxu0 %v782
  %1743 = vmatmul.mubr.bf16.gmra.mrb[0].mxu0 %v781
  %v1744 = vpop.f32.mrb[0].mxu0
  %v1745 = vadd.f32 %v1648, %v1744
  %v1746 = vpop.f32.mrb[0].mxu0
  %v1747 = vpop.f32.mrb[0].mxu0
  %v1748 = vadd.f32 %v1651, %v1747
  %v1749 = vpop.f32.mrb[0].mxu0
  %1750 = vmatprep.mubr.bf16.mxu0 %v791
  %1751 = vmatmul.mubr.bf16.gmra.mrb[0].mxu0 %v790
  %v1752 = vpop.f32.mrb[0].mxu0
  %v1753 = vadd.f32 %v1656, %v1752
  %v1754 = vpop.f32.mrb[0].mxu0
  %v1755 = vpop.f32.mrb[0].mxu0
  %v1756 = vadd.f32 %v1659, %v1755
  %v1757 = vpop.f32.mrb[0].mxu0
  %1758 = vmatprep.mubr.bf16.mxu0 %v800
  %1759 = vmatmul.mubr.bf16.gmra.mrb[0].mxu0 %v799
  %v1760 = vpop.f32.mrb[0].mxu0
  %v1761 = vadd.f32 %v1664, %v1760
  %v1762 = vpop.f32.mrb[0].mxu0
  %v1763 = vpop.f32.mrb[0].mxu0
  %v1764 = vadd.f32 %v1667, %v1763
  %v1765 = vpop.f32.mrb[0].mxu0
  %1766 = vmatprep.mubr.bf16.mxu0 %v809
  %1767 = vmatmul.mubr.bf16.gmra.mrb[0].mxu0 %v808
  %v1768 = vpop.f32.mrb[0].mxu0
  %v1769 = vadd.f32 %v1672, %v1768
  %v1770 = vpop.f32.mrb[0].mxu0
  %v1771 = vpop.f32.mrb[0].mxu0
  %v1772 = vadd.f32 %v1675, %v1771
  %v1773 = vpop.f32.mrb[0].mxu0
  %1774 = vdwg.mxu0
  %1775 = vmatprep.subr.bf16.mxu0 0
  %1776 = vmatpush1.bf16.msra.mxu0 %v1307
  %1777 = vmatprep.subr.bf16.mxu0 0
  %1778 = vmatpush1.bf16.msra.mxu0 %v1308
  %1779 = vmatprep.subr.bf16.mxu0 0
  %1780 = vmatpush1.bf16.msra.mxu0 %v1309
  %1781 = vmatprep.subr.bf16.mxu0 0
  %1782 = vmatpush1.bf16.msra.mxu0 %v1310
  %1783 = vmatprep.subr.bf16.mxu0 0
  %1784 = vmatpush1.bf16.msra.mxu0 %v1311
  %1785 = vmatprep.subr.bf16.mxu0 0
  %1786 = vmatpush1.bf16.msra.mxu0 %v1312
  %1787 = vmatprep.subr.bf16.mxu0 0
  %1788 = vmatpush1.bf16.msra.mxu0 %v1313
  %1789 = vmatprep.subr.bf16.mxu0 0
  %1790 = vmatpush1.bf16.msra.mxu0 %v1314
  %1791 = vmatprep.subr.bf16.mxu0 0
  %1792 = vmatpush1.bf16.msra.mxu0 0
  %1793 = vmatprep.subr.bf16.mxu0 0
  %1794 = vmatpush1.bf16.msra.mxu0 0
  %1795 = vmatprep.subr.bf16.mxu0 0
  %1796 = vmatpush1.bf16.msra.mxu0 0
  %1797 = vmatprep.subr.bf16.mxu0 0
  %1798 = vmatpush1.bf16.msra.mxu0 0
  %1799 = vmatprep.subr.bf16.mxu0 0
  %1800 = vmatpush1.bf16.msra.mxu0 0
  %1801 = vmatprep.subr.bf16.mxu0 0
  %1802 = vmatpush1.bf16.msra.mxu0 0
  %1803 = vmatprep.subr.bf16.mxu0 0
  %1804 = vmatpush1.bf16.msra.mxu0 0
  %1805 = vmatprep.subr.bf16.mxu0 0
  %1806 = vmatpush1.bf16.msra.mxu0 0
  %1807 = vmatprep.mubr.bf16.mxu0 0
  %1808 = vmatmul.mubr.bf16.gmra.mrb[0].mxu0 %v747
  %v1809 = vpop.f32.mrb[0].mxu0
  %v1810 = vadd.f32 %v1713, %v1809
  %v1811 = vpop.f32.mrb[0].mxu0
  %v1812 = vpop.f32.mrb[0].mxu0
  %v1813 = vadd.f32 %v1716, %v1812
  %v1814 = vpop.f32.mrb[0].mxu0
  %1815 = vmatprep.mubr.bf16.mxu0 0
  %1816 = vmatmul.mubr.bf16.gmra.mrb[0].mxu0 %v756
  %v1817 = vpop.f32.mrb[0].mxu0
  %v1818 = vadd.f32 %v1721, %v1817
  %v1819 = vpop.f32.mrb[0].mxu0
  %v1820 = vpop.f32.mrb[0].mxu0
  %v1821 = vadd.f32 %v1724, %v1820
  %v1822 = vpop.f32.mrb[0].mxu0
  %1823 = vmatprep.mubr.bf16.mxu0 0
  %1824 = vmatmul.mubr.bf16.gmra.mrb[0].mxu0 %v765
  %v1825 = vpop.f32.mrb[0].mxu0
  %v1826 = vadd.f32 %v1729, %v1825
  %v1827 = vpop.f32.mrb[0].mxu0
  %v1828 = vpop.f32.mrb[0].mxu0
  %v1829 = vadd.f32 %v1732, %v1828
  %v1830 = vpop.f32.mrb[0].mxu0
  %1831 = vmatprep.mubr.bf16.mxu0 0
  %1832 = vmatmul.mubr.bf16.gmra.mrb[0].mxu0 %v774
  %v1833 = vpop.f32.mrb[0].mxu0
  %v1834 = vadd.f32 %v1737, %v1833
  %v1835 = vpop.f32.mrb[0].mxu0
  %v1836 = vpop.f32.mrb[0].mxu0
  %v1837 = vadd.f32 %v1740, %v1836
  %v1838 = vpop.f32.mrb[0].mxu0
  %1839 = vmatprep.mubr.bf16.mxu0 0
  %1840 = vmatmul.mubr.bf16.gmra.mrb[0].mxu0 %v783
  %v1841 = vpop.f32.mrb[0].mxu0
  %v1842 = vadd.f32 %v1745, %v1841
  %v1843 = vpop.f32.mrb[0].mxu0
  %v1844 = vpop.f32.mrb[0].mxu0
  %v1845 = vadd.f32 %v1748, %v1844
  %v1846 = vpop.f32.mrb[0].mxu0
  %1847 = vmatprep.mubr.bf16.mxu0 0
  %1848 = vmatmul.mubr.bf16.gmra.mrb[0].mxu0 %v792
  %v1849 = vpop.f32.mrb[0].mxu0
  %v1850 = vadd.f32 %v1753, %v1849
  %v1851 = vpop.f32.mrb[0].mxu0
  %v1852 = vpop.f32.mrb[0].mxu0
  %v1853 = vadd.f32 %v1756, %v1852
  %v1854 = vpop.f32.mrb[0].mxu0
  %1855 = vmatprep.mubr.bf16.mxu0 0
  %1856 = vmatmul.mubr.bf16.gmra.mrb[0].mxu0 %v801
  %v1857 = vpop.f32.mrb[0].mxu0
  %v1858 = vadd.f32 %v1761, %v1857
  %v1859 = vpop.f32.mrb[0].mxu0
  %v1860 = vpop.f32.mrb[0].mxu0
  %v1861 = vadd.f32 %v1764, %v1860
  %v1862 = vpop.f32.mrb[0].mxu0
  %1863 = vmatprep.mubr.bf16.mxu0 0
  %1864 = vmatmul.mubr.bf16.gmra.mrb[0].mxu0 %v810
  %v1865 = vpop.f32.mrb[0].mxu0
  %v1866 = vadd.f32 %v1769, %v1865
  %v1867 = vpop.f32.mrb[0].mxu0
  %v1868 = vpop.f32.mrb[0].mxu0
  %v1869 = vadd.f32 %v1772, %v1868
  %v1870 = vpop.f32.mrb[0].mxu0
  %1871 = vdwg.mxu0
  %v1872 = vld [vmem:[%s5] sm:$0x1]
  %v1874 = vlaneseq
  %v1875 = vshrl.u32 %v1874, 7
  %v1876 = vsub.s32 0, %v1875
  %v1877 = vrot.slane %v1872, %v1876
  %v1879 = vmul.f32 %v1810, %v1877
  %v1880 = vmul.f32 %v1813, %v1877
  %v1881 = vmul.f32 %v1818, %v1877
  %v1882 = vmul.f32 %v1821, %v1877
  %v1883 = vmul.f32 %v1826, %v1877
  %v1884 = vmul.f32 %v1829, %v1877
  %v1885 = vmul.f32 %v1834, %v1877
  %v1886 = vmul.f32 %v1837, %v1877
  %v1887 = vmul.f32 %v1842, %v1877
  %v1888 = vmul.f32 %v1845, %v1877
  %v1889 = vmul.f32 %v1850, %v1877
  %v1890 = vmul.f32 %v1853, %v1877
  %v1891 = vmul.f32 %v1858, %v1877
  %v1892 = vmul.f32 %v1861, %v1877
  %v1893 = vmul.f32 %v1866, %v1877
  %v1894 = vmul.f32 %v1869, %v1877
  %v1895 = vld [vmem:[%s6] sm:$0x1]
  %v1897 = vlaneseq
  %v1898 = vshrl.u32 %v1897, 7
  %v1899 = vsub.s32 0, %v1898
  %v1900 = vrot.slane %v1895, %v1899
  %v1902 = vadd.f32 %v1879, %v1900
  %v1903 = vadd.f32 %v1880, %v1900
  %v1904 = vadd.f32 %v1881, %v1900
  %v1905 = vadd.f32 %v1882, %v1900
  %v1906 = vadd.f32 %v1883, %v1900
  %v1907 = vadd.f32 %v1884, %v1900
  %v1908 = vadd.f32 %v1885, %v1900
  %v1909 = vadd.f32 %v1886, %v1900
  %v1910 = vadd.f32 %v1887, %v1900
  %v1911 = vadd.f32 %v1888, %v1900
  %v1912 = vadd.f32 %v1889, %v1900
  %v1913 = vadd.f32 %v1890, %v1900
  %v1914 = vadd.f32 %v1891, %v1900
  %v1915 = vadd.f32 %v1892, %v1900
  %v1916 = vadd.f32 %v1893, %v1900
  %v1917 = vadd.f32 %v1894, %v1900
  %v1918 = vadd.f32 %v1902, %v314
  %v1919 = vadd.f32 %v1903, %v316
  %v1920 = vadd.f32 %v1904, %v318
  %v1921 = vadd.f32 %v1905, %v320
  %v1922 = vadd.f32 %v1906, %v322
  %v1923 = vadd.f32 %v1907, %v324
  %v1924 = vadd.f32 %v1908, %v326
  %v1925 = vadd.f32 %v1909, %v328
  %v1926 = vadd.f32 %v1910, %v330
  %v1927 = vadd.f32 %v1911, %v332
  %v1928 = vadd.f32 %v1912, %v334
  %v1929 = vadd.f32 %v1913, %v336
  %v1930 = vadd.f32 %v1914, %v338
  %v1931 = vadd.f32 %v1915, %v340
  %v1932 = vadd.f32 %v1916, %v342
  %v1933 = vadd.f32 %v1917, %v344
  %vm1934 = vcmp.ge.f32.partialorder %v1918, 0.0
  %vm1935 = vcmp.ge.f32.partialorder %v1919, 0.0
  %vm1936 = vcmp.ge.f32.partialorder %v1920, 0.0
  %vm1937 = vcmp.ge.f32.partialorder %v1921, 0.0
  %vm1938 = vcmp.ge.f32.partialorder %v1922, 0.0
  %vm1939 = vcmp.ge.f32.partialorder %v1923, 0.0
  %vm1940 = vcmp.ge.f32.partialorder %v1924, 0.0
  %vm1941 = vcmp.ge.f32.partialorder %v1925, 0.0
  %vm1942 = vcmp.ge.f32.partialorder %v1926, 0.0
  %vm1943 = vcmp.ge.f32.partialorder %v1927, 0.0
  %vm1944 = vcmp.ge.f32.partialorder %v1928, 0.0
  %vm1945 = vcmp.ge.f32.partialorder %v1929, 0.0
  %vm1946 = vcmp.ge.f32.partialorder %v1930, 0.0
  %vm1947 = vcmp.ge.f32.partialorder %v1931, 0.0
  %vm1948 = vcmp.ge.f32.partialorder %v1932, 0.0
  %vm1949 = vcmp.ge.f32.partialorder %v1933, 0.0
  %v1950 = vmul.f32 %v1918, 0.2
  %v1951 = vmul.f32 %v1919, 0.2
  %v1952 = vmul.f32 %v1920, 0.2
  %v1953 = vmul.f32 %v1921, 0.2
  %v1954 = vmul.f32 %v1922, 0.2
  %v1955 = vmul.f32 %v1923, 0.2
  %v1956 = vmul.f32 %v1924, 0.2
  %v1957 = vmul.f32 %v1925, 0.2
  %v1958 = vmul.f32 %v1926, 0.2
  %v1959 = vmul.f32 %v1927, 0.2
  %v1960 = vmul.f32 %v1928, 0.2
  %v1961 = vmul.f32 %v1929, 0.2
  %v1962 = vmul.f32 %v1930, 0.2
  %v1963 = vmul.f32 %v1931, 0.2
  %v1964 = vmul.f32 %v1932, 0.2
  %v1965 = vmul.f32 %v1933, 0.2
  %v1966 = vsel %vm1934, %v1918, %v1950
  %v1967 = vsel %vm1935, %v1919, %v1951
  %v1968 = vsel %vm1936, %v1920, %v1952
  %v1969 = vsel %vm1937, %v1921, %v1953
  %v1970 = vsel %vm1938, %v1922, %v1954
  %v1971 = vsel %vm1939, %v1923, %v1955
  %v1972 = vsel %vm1940, %v1924, %v1956
  %v1973 = vsel %vm1941, %v1925, %v1957
  %v1974 = vsel %vm1942, %v1926, %v1958
  %v1975 = vsel %vm1943, %v1927, %v1959
  %v1976 = vsel %vm1944, %v1928, %v1960
  %v1977 = vsel %vm1945, %v1929, %v1961
  %v1978 = vsel %vm1946, %v1930, %v1962
  %v1979 = vsel %vm1947, %v1931, %v1963
  %v1980 = vsel %vm1948, %v1932, %v1964
  %v1981 = vsel %vm1949, %v1933, %v1965
  %v1982 = vpack.c.bf16 %v1967, %v1966
  %v1983 = vpack.c.bf16 %v1969, %v1968
  %v1984 = vpack.c.bf16 %v1971, %v1970
  %v1985 = vpack.c.bf16 %v1973, %v1972
  %v1986 = vpack.c.bf16 %v1975, %v1974
  %v1987 = vpack.c.bf16 %v1977, %v1976
  %v1988 = vpack.c.bf16 %v1979, %v1978
  %v1989 = vpack.c.bf16 %v1981, %v1980
  %v1998 = vunpack.c.l.b16 %v1982
  %v1999 = vunpack.c.h.b16 %v1982
  %v2000 = vunpack.c.l.b16 %v1983
  %v2001 = vunpack.c.h.b16 %v1983
  %v2002 = vunpack.c.l.b16 %v1984
  %v2003 = vunpack.c.h.b16 %v1984
  %v2004 = vunpack.c.l.b16 %v1985
  %v2005 = vunpack.c.h.b16 %v1985
  %v2006 = vunpack.c.l.b16 %v1986
  %v2007 = vunpack.c.h.b16 %v1986
  %v2008 = vunpack.c.l.b16 %v1987
  %v2009 = vunpack.c.h.b16 %v1987
  %v2010 = vunpack.c.l.b16 %v1988
  %v2011 = vunpack.c.h.b16 %v1988
  %v2012 = vunpack.c.l.b16 %v1989
  %v2013 = vunpack.c.h.b16 %v1989
  %v2014 = vpack.c.b16 %v1998, %v1998
  %v2015 = vpack.c.b16 %v1999, %v1999
  %v2016 = vpack.c.b16 %v2000, %v2000
  %v2017 = vpack.c.b16 %v2001, %v2001
  %v2018 = vpack.c.b16 %v2002, %v2002
  %v2019 = vpack.c.b16 %v2003, %v2003
  %v2020 = vpack.c.b16 %v2004, %v2004
  %v2021 = vpack.c.b16 %v2005, %v2005
  %v2022 = vpack.c.b16 %v2006, %v2006
  %v2023 = vpack.c.b16 %v2007, %v2007
  %v2024 = vpack.c.b16 %v2008, %v2008
  %v2025 = vpack.c.b16 %v2009, %v2009
  %v2026 = vpack.c.b16 %v2010, %v2010
  %v2027 = vpack.c.b16 %v2011, %v2011
  %v2028 = vpack.c.b16 %v2012, %v2012
  %v2029 = vpack.c.b16 %v2013, %v2013
  %2046 = vst [vmem:[%s7] sm:$0xf] %v2014
  %2047 = vst [vmem:[%s7 + $0x4] sm:$0xf] %v2015
  %2048 = vst [vmem:[%s7 + $0x8] sm:$0xf] %v2016
  %2049 = vst [vmem:[%s7 + $0xc] sm:$0xf] %v2017
  %2050 = vst [vmem:[%s7 + $0x10] sm:$0xf] %v2018
  %2051 = vst [vmem:[%s7 + $0x14] sm:$0xf] %v2019
  %2052 = vst [vmem:[%s7 + $0x18] sm:$0xf] %v2020
  %2053 = vst [vmem:[%s7 + $0x1c] sm:$0xf] %v2021
  %2054 = vst [vmem:[%s7 + $0x20] sm:$0xf] %v2022
  %2055 = vst [vmem:[%s7 + $0x24] sm:$0xf] %v2023
  %2056 = vst [vmem:[%s7 + $0x28] sm:$0xf] %v2024
  %2057 = vst [vmem:[%s7 + $0x2c] sm:$0xf] %v2025
  %2058 = vst [vmem:[%s7 + $0x30] sm:$0xf] %v2026
  %2059 = vst [vmem:[%s7 + $0x34] sm:$0xf] %v2027
  %2060 = vst [vmem:[%s7 + $0x38] sm:$0xf] %v2028
  %2061 = vst [vmem:[%s7 + $0x3c] sm:$0xf] %v2029
  // Predicated region
  $region30: #{residual_conv_forward.1} parent=0 // pred_check
    _
  $region31: #{residual_conv_forward.1} parent=0 // pred_check_branch
    %2063 = sbr.rel (0) target = $region33
  $region32: #{residual_conv_forward.1} parent=0 // pred_region
    _
  $region33: #{residual_conv_forward.1} parent=0 // pred_fallthru
    _
  // Predicated region
  $region34: #{residual_conv_forward.1} parent=0 // pred_check
    _
  $region35: #{residual_conv_forward.1} parent=0 // pred_check_branch
    %2065 = sbr.rel (0) target = $region37
  $region36: #{residual_conv_forward.1} parent=0 // pred_region
    _
  $region37: #{residual_conv_forward.1} parent=0 // pred_fallthru
    _

</llo_original>
